<compile_context>
chip_gen: v7x
topology: tpu7x:2x2x1
jax: 0.10.0
libtpu: 0.0.40
codegen_flags: <defaults>
</compile_context>

<pallas_src>
import jax
import jax.numpy as jnp
from jax.experimental import pallas as pl
from jax.experimental.pallas import tpu as pltpu


# ---------------------------------------------------------------------------
# Kernel 1: fused (nearest-2x upsample + 3x3 conv) as ONE bf16 MXU dot per image,
# plus f32 BN partial sums.  Output is already in the lane-dense packed layout.
# ---------------------------------------------------------------------------
def conv_phase_kernel(xp_ref, w_ref, y_ref, stats_ref, lhs_ref):
    # xp_ref   : (1, H+2, W+2, Cin)      zero-padded original-res input (bf16)
    # w_ref    : (9*Cin*pack, pack*lane) block-diag phase-folded weights (bf16)
    # y_ref    : (1, rows, pack*lane)    conv out (bf16), rows = H*W/pack
    #            y[r, q*lane + p*Cout + co] = conv_phase[(q*rows + r), p*Cout + co]
    # stats_ref: (1, 2, pack*lane)       [per-lane sums, per-lane sums of squares] (f32)
    # lhs_ref  : (rows, 9*Cin*pack)      im2col scratch (bf16, VMEM)
    _, hp, wp, cin = xp_ref.shape
    w = wp - 2
    rows, kbig = lhs_ref.shape
    pack = kbig // (9 * cin)
    hb = rows // w                       # spatial rows per packed row-block

    x = xp_ref[0]                        # (H+2, W+2, Cin), lives in vregs/VMEM

    # Build the K-folded im2col LHS once: 9*pack window slices, each a cheap
    # (hb, W, Cin) -> (rows, Cin) sublane-merge reshape + a static lane-offset store.
    for q in range(pack):                                  # static unroll
        base = q * hb
        for ty in range(3):
            for tx in range(3):
                col0 = (q * 9 + ty * 3 + tx) * cin
                lhs_ref[:, col0:col0 + cin] = (
                    x[base + ty:base + ty + hb, tx:tx + w, :].reshape(rows, cin))

    # Single MXU dot: M=rows, K=9*Cin*pack, N=pack*4*Cout (lane-dense), f32 accum.
    acc = jnp.dot(lhs_ref[...], w_ref[...], preferred_element_type=jnp.float32)

    # BatchNorm partial sums in f32 (before the bf16 downcast); direct slice stores.
    stats_ref[:, 0:1, :] = jnp.sum(acc, axis=0, keepdims=True)[None]
    stats_ref[:, 1:2, :] = jnp.sum(acc * acc, axis=0, keepdims=True)[None]

    # Lane-dense (rows, 128) unmasked store of the heavy intermediate, in bf16.
    y_ref[...] = acc[None].astype(y_ref.dtype)


# ---------------------------------------------------------------------------
# Kernel 2: fused BN affine + LeakyReLU(0.01) on the lane-dense packed layout.
# ---------------------------------------------------------------------------
def bn_lrelu_kernel(y_ref, scale_ref, shift_ref, o_ref):
    # y_ref: (1, TM, L) bf16 conv intermediate (L = pack*4*Cout, 128 here)
    # scale/shift: (1, L) f32 per-lane BN scale/shift (channel pattern tiled)
    # o_ref: (1, TM, L) out_dtype
    z = (y_ref[...].astype(jnp.float32) * scale_ref[...][:, None, :]
         + shift_ref[...][:, None, :])
    o_ref[...] = jnp.where(z >= 0.0, z, 0.01 * z).astype(o_ref.dtype)


# ---------------------------------------------------------------------------
# Fold the nearest-2x upsample into the 3x3 weights (tiny, done once in JAX).
# ---------------------------------------------------------------------------
def _phase_folded_weights(w_oihw):
    """Returns (9, Cin, 4*Cout).

    Tap t = ty*3+tx reads the original-resolution window x_pad[ty:ty+H, tx:tx+W];
    column p*Cout+co of tap t holds the collapsed weight this tap contributes to
    sub-pixel phase p = 2*py+px of the 2x-upsampled 3x3 conv (zero if unused).
    """
    cout, cin, _, _ = w_oihw.shape
    w_hwio = jnp.transpose(w_oihw, (2, 3, 1, 0)).astype(jnp.float32)   # (3,3,Cin,Cout)
    # A[py][ky, dy] = 1 iff upsampled tap ky collapses onto relative row dy in {0,1}.
    a0 = jnp.array([[1.0, 0.0], [0.0, 1.0], [0.0, 1.0]], jnp.float32)  # phase offset 0
    a1 = jnp.array([[1.0, 0.0], [1.0, 0.0], [0.0, 1.0]], jnp.float32)  # phase offset 1
    a = jnp.stack([a0, a1])                                            # (2, 3, 2)
    w_eff = jnp.einsum("pkd,qle,klio->pqdeio", a, a, w_hwio)
    wall = jnp.zeros((3, 3, cin, 4, cout), jnp.float32)
    for py in range(2):
        for px in range(2):
            p = 2 * py + px
            for dy in range(2):
                for dx in range(2):
                    # tap (ty, tx) = (dy + py, dx + px) feeds phase p
                    wall = wall.at[dy + py, dx + px, :, p, :].set(w_eff[py, px, dy, dx])
    return wall.reshape(9, cin, 4 * cout)


# ---------------------------------------------------------------------------
# Wrapper
# ---------------------------------------------------------------------------
def upconv_block(x_nchw, w_oihw, bias, gamma, beta, eps=1e-5,
                 out_dtype=jnp.float32):
    # `bias` accepted for signature parity; it cancels exactly under train-mode BN.
    del bias
    n, cin, h, w = x_nchw.shape
    cout = w_oihw.shape[0]
    lane = 4 * cout

    # Lane packing: fold `pack` contiguous row-blocks into the lane dim so the heavy
    # conv-intermediate store/read is 128-lane dense even when 4*Cout < 128.  For
    # realistic channel counts (4*Cout >= 128) pack degenerates to 1 automatically.
    pack = 1
    if lane < 128 and 128 % lane == 0 and h % (128 // lane) == 0:
        pack = 128 // lane
    big_lane = pack * lane
    rows = (h * w) // pack
    kbig = 9 * cin * pack

    # Layout glue touches only the SMALL original-resolution input (bf16).
    x_nhwc = jnp.transpose(x_nchw, (0, 2, 3, 1)).astype(jnp.bfloat16)
    x_pad = jnp.pad(x_nhwc, ((0, 0), (1, 1), (1, 1), (0, 0)))

    # Phase-folded weights, replicated block-diagonally so the packed lane groups come
    # straight out of one matmul: (9*Cin*pack, pack*4*Cout), bf16 for the MXU.
    w_phase = _phase_folded_weights(w_oihw).reshape(9 * cin, lane)
    w_big = jnp.kron(jnp.eye(pack, dtype=jnp.float32), w_phase).astype(jnp.bfloat16)

    # --- kernel 1: fused upsample + conv (one bf16 dot) + f32 BN partial sums --------
    # Per-image blocks; for very large images a spatial tile axis with halo would be
    # needed to stay under v7x's 64 MiB VMEM, but decoder-scale images fit comfortably.
    conv_y, stats = pl.pallas_call(
        conv_phase_kernel,
        out_shape=(jax.ShapeDtypeStruct((n, rows, big_lane), jnp.bfloat16),
                   jax.ShapeDtypeStruct((n, 2, big_lane), jnp.float32)),
        grid=(n,),
        in_specs=[
            pl.BlockSpec((1, h + 2, w + 2, cin), lambda i: (i, 0, 0, 0)),
            pl.BlockSpec((kbig, big_lane), lambda i: (0, 0)),
        ],
        out_specs=(
            pl.BlockSpec((1, rows, big_lane), lambda i: (i, 0, 0)),
            pl.BlockSpec((1, 2, big_lane), lambda i: (i, 0, 0)),
        ),
        scratch_shapes=[pltpu.VMEM((rows, kbig), jnp.bfloat16)],
        compiler_params=pltpu.CompilerParams(
            dimension_semantics=("parallel",),
            vmem_limit_bytes=32 * 1024 * 1024),
    )(x_pad, w_big)

    # --- BN batch statistics from the tiny f32 partial sums --------------------------
    # (single-pass E[x^2]-E[x]^2 in f32: fine for conv activations at this scale)
    s = jnp.sum(stats, axis=0).reshape(2, pack, 4, cout).sum(axis=(1, 2))   # (2, Cout)
    cnt = jnp.float32(n * 4 * h * w)
    mean = s[0] / cnt
    var = s[1] / cnt - mean * mean                                          # biased
    scale = gamma.astype(jnp.float32) / jnp.sqrt(var + eps)
    shift = beta.astype(jnp.float32) - mean * scale
    lane_scale = jnp.tile(scale, 4 * pack).reshape(1, big_lane)
    lane_shift = jnp.tile(shift, 4 * pack).reshape(1, big_lane)

    # --- kernel 2: BN affine + LeakyReLU, lane-dense, tiled over (batch, rows) -------
    tm = rows
    if rows > 1024:
        for cand in (1024, 512, 256):
            if rows % cand == 0:
                tm = cand
                break

    z = pl.pallas_call(
        bn_lrelu_kernel,
        out_shape=jax.ShapeDtypeStruct((n, rows, big_lane), out_dtype),
        grid=(n, rows // tm),
        in_specs=[
            pl.BlockSpec((1, tm, big_lane), lambda i, j: (i, j, 0)),
            pl.BlockSpec((1, big_lane), lambda i, j: (0, 0)),
            pl.BlockSpec((1, big_lane), lambda i, j: (0, 0)),
        ],
        out_specs=pl.BlockSpec((1, tm, big_lane), lambda i, j: (i, j, 0)),
        compiler_params=pltpu.CompilerParams(
            dimension_semantics=("parallel", "parallel"),
            vmem_limit_bytes=32 * 1024 * 1024),
    )(conv_y, lane_scale, lane_shift)

    # Packed (row-block q, phase) layout -> NCHW:
    #   z[n, i_w*W + j, q*4*Cout + (2*py+px)*Cout + co] -> out[n, co, 2*(q*H/pack+i_w)+py, 2*j+px]
    # Single XLA transpose; de-interleaving in-kernel would need lane-strided stores.
    z = z.reshape(n, h // pack, w, pack, 2, 2, cout)
    out = jnp.transpose(z, (0, 6, 3, 1, 4, 2, 5)).reshape(n, cout, 2 * h, 2 * w)
    return out


# ---------------------------------------------------------------------------
# Pure-JAX reference (same semantics, keeps the conv bias) for a sanity check.
# ---------------------------------------------------------------------------
def upconv_block_ref(x_nchw, w_oihw, bias, gamma, beta, eps=1e-5):
    x_up = jnp.repeat(jnp.repeat(x_nchw, 2, axis=2), 2, axis=3)
    conv = jax.lax.conv_general_dilated(
        x_up.astype(jnp.float32), w_oihw.astype(jnp.float32),
        window_strides=(1, 1), padding=((1, 1), (1, 1)),
        dimension_numbers=("NCHW", "OIHW", "NCHW"),
    ) + bias[None, :, None, None]
    mean = conv.mean(axis=(0, 2, 3), keepdims=True)
    var = jnp.square(conv - mean).mean(axis=(0, 2, 3), keepdims=True)
    z = gamma[None, :, None, None] * (conv - mean) / jnp.sqrt(var + eps) \
        + beta[None, :, None, None]
    return jnp.where(z >= 0, z, 0.01 * z)


if __name__ == "__main__":
    key = jax.random.PRNGKey(0)
    k_x, k_w, k_b = jax.random.split(key, 3)

    N, Cin, H, W = 2, 4, 16, 16
    Cout = 8

    x = jax.random.normal(k_x, (N, Cin, H, W), dtype=jnp.float32)
    # deterministic parameter init (synthetic, not a checkpoint)
    w = jax.random.normal(k_w, (Cout, Cin, 3, 3), dtype=jnp.float32) * 0.1
    b = jax.random.normal(k_b, (Cout,), dtype=jnp.float32) * 0.1
    gamma = jnp.ones((Cout,), jnp.float32)   # BatchNorm2d default init
    beta = jnp.zeros((Cout,), jnp.float32)

    upconv = jax.jit(upconv_block)
    out = jax.block_until_ready(upconv(x, w, b, gamma, beta))

    ref = upconv_block_ref(x, w, b, gamma, beta)
    assert out.shape == (N, Cout, 2 * H, 2 * W)
    # bf16 MXU operands + bf16 intermediate -> slightly looser tolerance than pure f32;
    # BN statistics themselves are exact f32 partial sums.
    assert jnp.allclose(out, ref, rtol=2e-2, atol=3e-2), \
        float(jnp.max(jnp.abs(out - ref)))

    print("KERNEL_OK")
</pallas_src>

<mosaic_0001>
module attributes {stable_mosaic.version = 11 : i64} {
  func.func @conv_phase_kernel(%arg0: i32, %arg1: memref<1x18x18x4xbf16, #tpu.memory_space<vmem>>, %arg2: memref<144x128xbf16, #tpu.memory_space<vmem>>, %arg3: memref<1x64x128xbf16, #tpu.memory_space<vmem>>, %arg4: memref<1x2x128xf32, #tpu.memory_space<vmem>>, %arg5: memref<64x144xbf16, #tpu.memory_space<vmem>>) attributes {dimension_semantics = [#tpu.dimension_semantics<parallel>], iteration_bounds = array<i64: 2>, scalar_prefetch = 0 : i64, scratch_operands = 1 : i64, tpu.core_type = #tpu.core_type<tc>, window_params = [{transform_indices = @transform_0, window_bounds = array<i64: 1, 18, 18, 4>}, {pipeline_mode = #tpu.pipeline_mode<synchronous>, transform_indices = @transform_1, window_bounds = array<i64: 144, 128>}, {transform_indices = @transform_2, window_bounds = array<i64: 1, 64, 128>}, {transform_indices = @transform_3, window_bounds = array<i64: 1, 2, 128>}]} {
    %c0 = arith.constant 0 : index
    %c0_0 = arith.constant 0 : index
    %c0_1 = arith.constant 0 : index
    %c0_2 = arith.constant 0 : index
    %0 = vector.load %arg1[%c0, %c0_0, %c0_1, %c0_2] : memref<1x18x18x4xbf16, #tpu.memory_space<vmem>>, vector<1x18x18x4xbf16>
    %1 = vector.shape_cast %0 : vector<1x18x18x4xbf16> to vector<18x18x4xbf16>
    %2 = vector.extract_strided_slice %1 {offsets = [0, 0, 0], sizes = [4, 16, 4], strides = [1, 1, 1]} : vector<18x18x4xbf16> to vector<4x16x4xbf16>
    %3 = vector.shape_cast %2 : vector<4x16x4xbf16> to vector<64x4xbf16>
    %c0_3 = arith.constant 0 : index
    %c0_4 = arith.constant 0 : index
    %4 = vector.load %arg5[%c0_3, %c0_4] : memref<64x144xbf16, #tpu.memory_space<vmem>>, vector<64x4xbf16>
    tpu.vector_store %arg5[%c0_3, %c0_4], %3 {strides = array<i32>} : memref<64x144xbf16, #tpu.memory_space<vmem>>, vector<64x4xbf16>,
    %5 = vector.extract_strided_slice %1 {offsets = [0, 1, 0], sizes = [4, 16, 4], strides = [1, 1, 1]} : vector<18x18x4xbf16> to vector<4x16x4xbf16>
    %6 = vector.shape_cast %5 : vector<4x16x4xbf16> to vector<64x4xbf16>
    %c0_5 = arith.constant 0 : index
    %c4 = arith.constant 4 : index
    %7 = vector.load %arg5[%c0_5, %c4] : memref<64x144xbf16, #tpu.memory_space<vmem>>, vector<64x4xbf16>
    tpu.vector_store %arg5[%c0_5, %c4], %6 {strides = array<i32>} : memref<64x144xbf16, #tpu.memory_space<vmem>>, vector<64x4xbf16>,
    %8 = vector.extract_strided_slice %1 {offsets = [0, 2, 0], sizes = [4, 16, 4], strides = [1, 1, 1]} : vector<18x18x4xbf16> to vector<4x16x4xbf16>
    %9 = vector.shape_cast %8 : vector<4x16x4xbf16> to vector<64x4xbf16>
    %c0_6 = arith.constant 0 : index
    %c8 = arith.constant 8 : index
    %10 = vector.load %arg5[%c0_6, %c8] : memref<64x144xbf16, #tpu.memory_space<vmem>>, vector<64x4xbf16>
    tpu.vector_store %arg5[%c0_6, %c8], %9 {strides = array<i32>} : memref<64x144xbf16, #tpu.memory_space<vmem>>, vector<64x4xbf16>,
    %11 = vector.extract_strided_slice %1 {offsets = [1, 0, 0], sizes = [4, 16, 4], strides = [1, 1, 1]} : vector<18x18x4xbf16> to vector<4x16x4xbf16>
    %12 = vector.shape_cast %11 : vector<4x16x4xbf16> to vector<64x4xbf16>
    %c0_7 = arith.constant 0 : index
    %c12 = arith.constant 12 : index
    %13 = vector.load %arg5[%c0_7, %c12] : memref<64x144xbf16, #tpu.memory_space<vmem>>, vector<64x4xbf16>
    tpu.vector_store %arg5[%c0_7, %c12], %12 {strides = array<i32>} : memref<64x144xbf16, #tpu.memory_space<vmem>>, vector<64x4xbf16>,
    %14 = vector.extract_strided_slice %1 {offsets = [1, 1, 0], sizes = [4, 16, 4], strides = [1, 1, 1]} : vector<18x18x4xbf16> to vector<4x16x4xbf16>
    %15 = vector.shape_cast %14 : vector<4x16x4xbf16> to vector<64x4xbf16>
    %c0_8 = arith.constant 0 : index
    %c16 = arith.constant 16 : index
    %16 = vector.load %arg5[%c0_8, %c16] : memref<64x144xbf16, #tpu.memory_space<vmem>>, vector<64x4xbf16>
    tpu.vector_store %arg5[%c0_8, %c16], %15 {strides = array<i32>} : memref<64x144xbf16, #tpu.memory_space<vmem>>, vector<64x4xbf16>,
    %17 = vector.extract_strided_slice %1 {offsets = [1, 2, 0], sizes = [4, 16, 4], strides = [1, 1, 1]} : vector<18x18x4xbf16> to vector<4x16x4xbf16>
    %18 = vector.shape_cast %17 : vector<4x16x4xbf16> to vector<64x4xbf16>
    %c0_9 = arith.constant 0 : index
    %c20 = arith.constant 20 : index
    %19 = vector.load %arg5[%c0_9, %c20] : memref<64x144xbf16, #tpu.memory_space<vmem>>, vector<64x4xbf16>
    tpu.vector_store %arg5[%c0_9, %c20], %18 {strides = array<i32>} : memref<64x144xbf16, #tpu.memory_space<vmem>>, vector<64x4xbf16>,
    %20 = vector.extract_strided_slice %1 {offsets = [2, 0, 0], sizes = [4, 16, 4], strides = [1, 1, 1]} : vector<18x18x4xbf16> to vector<4x16x4xbf16>
    %21 = vector.shape_cast %20 : vector<4x16x4xbf16> to vector<64x4xbf16>
    %c0_10 = arith.constant 0 : index
    %c24 = arith.constant 24 : index
    %22 = vector.load %arg5[%c0_10, %c24] : memref<64x144xbf16, #tpu.memory_space<vmem>>, vector<64x4xbf16>
    tpu.vector_store %arg5[%c0_10, %c24], %21 {strides = array<i32>} : memref<64x144xbf16, #tpu.memory_space<vmem>>, vector<64x4xbf16>,
    %23 = vector.extract_strided_slice %1 {offsets = [2, 1, 0], sizes = [4, 16, 4], strides = [1, 1, 1]} : vector<18x18x4xbf16> to vector<4x16x4xbf16>
    %24 = vector.shape_cast %23 : vector<4x16x4xbf16> to vector<64x4xbf16>
    %c0_11 = arith.constant 0 : index
    %c28 = arith.constant 28 : index
    %25 = vector.load %arg5[%c0_11, %c28] : memref<64x144xbf16, #tpu.memory_space<vmem>>, vector<64x4xbf16>
    tpu.vector_store %arg5[%c0_11, %c28], %24 {strides = array<i32>} : memref<64x144xbf16, #tpu.memory_space<vmem>>, vector<64x4xbf16>,
    %26 = vector.extract_strided_slice %1 {offsets = [2, 2, 0], sizes = [4, 16, 4], strides = [1, 1, 1]} : vector<18x18x4xbf16> to vector<4x16x4xbf16>
    %27 = vector.shape_cast %26 : vector<4x16x4xbf16> to vector<64x4xbf16>
    %c0_12 = arith.constant 0 : index
    %c32 = arith.constant 32 : index
    %28 = vector.load %arg5[%c0_12, %c32] : memref<64x144xbf16, #tpu.memory_space<vmem>>, vector<64x4xbf16>
    tpu.vector_store %arg5[%c0_12, %c32], %27 {strides = array<i32>} : memref<64x144xbf16, #tpu.memory_space<vmem>>, vector<64x4xbf16>,
    %29 = vector.extract_strided_slice %1 {offsets = [4, 0, 0], sizes = [4, 16, 4], strides = [1, 1, 1]} : vector<18x18x4xbf16> to vector<4x16x4xbf16>
    %30 = vector.shape_cast %29 : vector<4x16x4xbf16> to vector<64x4xbf16>
    %c0_13 = arith.constant 0 : index
    %c36 = arith.constant 36 : index
    %31 = vector.load %arg5[%c0_13, %c36] : memref<64x144xbf16, #tpu.memory_space<vmem>>, vector<64x4xbf16>
    tpu.vector_store %arg5[%c0_13, %c36], %30 {strides = array<i32>} : memref<64x144xbf16, #tpu.memory_space<vmem>>, vector<64x4xbf16>,
    %32 = vector.extract_strided_slice %1 {offsets = [4, 1, 0], sizes = [4, 16, 4], strides = [1, 1, 1]} : vector<18x18x4xbf16> to vector<4x16x4xbf16>
    %33 = vector.shape_cast %32 : vector<4x16x4xbf16> to vector<64x4xbf16>
    %c0_14 = arith.constant 0 : index
    %c40 = arith.constant 40 : index
    %34 = vector.load %arg5[%c0_14, %c40] : memref<64x144xbf16, #tpu.memory_space<vmem>>, vector<64x4xbf16>
    tpu.vector_store %arg5[%c0_14, %c40], %33 {strides = array<i32>} : memref<64x144xbf16, #tpu.memory_space<vmem>>, vector<64x4xbf16>,
    %35 = vector.extract_strided_slice %1 {offsets = [4, 2, 0], sizes = [4, 16, 4], strides = [1, 1, 1]} : vector<18x18x4xbf16> to vector<4x16x4xbf16>
    %36 = vector.shape_cast %35 : vector<4x16x4xbf16> to vector<64x4xbf16>
    %c0_15 = arith.constant 0 : index
    %c44 = arith.constant 44 : index
    %37 = vector.load %arg5[%c0_15, %c44] : memref<64x144xbf16, #tpu.memory_space<vmem>>, vector<64x4xbf16>
    tpu.vector_store %arg5[%c0_15, %c44], %36 {strides = array<i32>} : memref<64x144xbf16, #tpu.memory_space<vmem>>, vector<64x4xbf16>,
    %38 = vector.extract_strided_slice %1 {offsets = [5, 0, 0], sizes = [4, 16, 4], strides = [1, 1, 1]} : vector<18x18x4xbf16> to vector<4x16x4xbf16>
    %39 = vector.shape_cast %38 : vector<4x16x4xbf16> to vector<64x4xbf16>
    %c0_16 = arith.constant 0 : index
    %c48 = arith.constant 48 : index
    %40 = vector.load %arg5[%c0_16, %c48] : memref<64x144xbf16, #tpu.memory_space<vmem>>, vector<64x4xbf16>
    tpu.vector_store %arg5[%c0_16, %c48], %39 {strides = array<i32>} : memref<64x144xbf16, #tpu.memory_space<vmem>>, vector<64x4xbf16>,
    %41 = vector.extract_strided_slice %1 {offsets = [5, 1, 0], sizes = [4, 16, 4], strides = [1, 1, 1]} : vector<18x18x4xbf16> to vector<4x16x4xbf16>
    %42 = vector.shape_cast %41 : vector<4x16x4xbf16> to vector<64x4xbf16>
    %c0_17 = arith.constant 0 : index
    %c52 = arith.constant 52 : index
    %43 = vector.load %arg5[%c0_17, %c52] : memref<64x144xbf16, #tpu.memory_space<vmem>>, vector<64x4xbf16>
    tpu.vector_store %arg5[%c0_17, %c52], %42 {strides = array<i32>} : memref<64x144xbf16, #tpu.memory_space<vmem>>, vector<64x4xbf16>,
    %44 = vector.extract_strided_slice %1 {offsets = [5, 2, 0], sizes = [4, 16, 4], strides = [1, 1, 1]} : vector<18x18x4xbf16> to vector<4x16x4xbf16>
    %45 = vector.shape_cast %44 : vector<4x16x4xbf16> to vector<64x4xbf16>
    %c0_18 = arith.constant 0 : index
    %c56 = arith.constant 56 : index
    %46 = vector.load %arg5[%c0_18, %c56] : memref<64x144xbf16, #tpu.memory_space<vmem>>, vector<64x4xbf16>
    tpu.vector_store %arg5[%c0_18, %c56], %45 {strides = array<i32>} : memref<64x144xbf16, #tpu.memory_space<vmem>>, vector<64x4xbf16>,
    %47 = vector.extract_strided_slice %1 {offsets = [6, 0, 0], sizes = [4, 16, 4], strides = [1, 1, 1]} : vector<18x18x4xbf16> to vector<4x16x4xbf16>
    %48 = vector.shape_cast %47 : vector<4x16x4xbf16> to vector<64x4xbf16>
    %c0_19 = arith.constant 0 : index
    %c60 = arith.constant 60 : index
    %49 = vector.load %arg5[%c0_19, %c60] : memref<64x144xbf16, #tpu.memory_space<vmem>>, vector<64x4xbf16>
    tpu.vector_store %arg5[%c0_19, %c60], %48 {strides = array<i32>} : memref<64x144xbf16, #tpu.memory_space<vmem>>, vector<64x4xbf16>,
    %50 = vector.extract_strided_slice %1 {offsets = [6, 1, 0], sizes = [4, 16, 4], strides = [1, 1, 1]} : vector<18x18x4xbf16> to vector<4x16x4xbf16>
    %51 = vector.shape_cast %50 : vector<4x16x4xbf16> to vector<64x4xbf16>
    %c0_20 = arith.constant 0 : index
    %c64 = arith.constant 64 : index
    %52 = vector.load %arg5[%c0_20, %c64] : memref<64x144xbf16, #tpu.memory_space<vmem>>, vector<64x4xbf16>
    tpu.vector_store %arg5[%c0_20, %c64], %51 {strides = array<i32>} : memref<64x144xbf16, #tpu.memory_space<vmem>>, vector<64x4xbf16>,
    %53 = vector.extract_strided_slice %1 {offsets = [6, 2, 0], sizes = [4, 16, 4], strides = [1, 1, 1]} : vector<18x18x4xbf16> to vector<4x16x4xbf16>
    %54 = vector.shape_cast %53 : vector<4x16x4xbf16> to vector<64x4xbf16>
    %c0_21 = arith.constant 0 : index
    %c68 = arith.constant 68 : index
    %55 = vector.load %arg5[%c0_21, %c68] : memref<64x144xbf16, #tpu.memory_space<vmem>>, vector<64x4xbf16>
    tpu.vector_store %arg5[%c0_21, %c68], %54 {strides = array<i32>} : memref<64x144xbf16, #tpu.memory_space<vmem>>, vector<64x4xbf16>,
    %56 = vector.extract_strided_slice %1 {offsets = [8, 0, 0], sizes = [4, 16, 4], strides = [1, 1, 1]} : vector<18x18x4xbf16> to vector<4x16x4xbf16>
    %57 = vector.shape_cast %56 : vector<4x16x4xbf16> to vector<64x4xbf16>
    %c0_22 = arith.constant 0 : index
    %c72 = arith.constant 72 : index
    %58 = vector.load %arg5[%c0_22, %c72] : memref<64x144xbf16, #tpu.memory_space<vmem>>, vector<64x4xbf16>
    tpu.vector_store %arg5[%c0_22, %c72], %57 {strides = array<i32>} : memref<64x144xbf16, #tpu.memory_space<vmem>>, vector<64x4xbf16>,
    %59 = vector.extract_strided_slice %1 {offsets = [8, 1, 0], sizes = [4, 16, 4], strides = [1, 1, 1]} : vector<18x18x4xbf16> to vector<4x16x4xbf16>
    %60 = vector.shape_cast %59 : vector<4x16x4xbf16> to vector<64x4xbf16>
    %c0_23 = arith.constant 0 : index
    %c76 = arith.constant 76 : index
    %61 = vector.load %arg5[%c0_23, %c76] : memref<64x144xbf16, #tpu.memory_space<vmem>>, vector<64x4xbf16>
    tpu.vector_store %arg5[%c0_23, %c76], %60 {strides = array<i32>} : memref<64x144xbf16, #tpu.memory_space<vmem>>, vector<64x4xbf16>,
    %62 = vector.extract_strided_slice %1 {offsets = [8, 2, 0], sizes = [4, 16, 4], strides = [1, 1, 1]} : vector<18x18x4xbf16> to vector<4x16x4xbf16>
    %63 = vector.shape_cast %62 : vector<4x16x4xbf16> to vector<64x4xbf16>
    %c0_24 = arith.constant 0 : index
    %c80 = arith.constant 80 : index
    %64 = vector.load %arg5[%c0_24, %c80] : memref<64x144xbf16, #tpu.memory_space<vmem>>, vector<64x4xbf16>
    tpu.vector_store %arg5[%c0_24, %c80], %63 {strides = array<i32>} : memref<64x144xbf16, #tpu.memory_space<vmem>>, vector<64x4xbf16>,
    %65 = vector.extract_strided_slice %1 {offsets = [9, 0, 0], sizes = [4, 16, 4], strides = [1, 1, 1]} : vector<18x18x4xbf16> to vector<4x16x4xbf16>
    %66 = vector.shape_cast %65 : vector<4x16x4xbf16> to vector<64x4xbf16>
    %c0_25 = arith.constant 0 : index
    %c84 = arith.constant 84 : index
    %67 = vector.load %arg5[%c0_25, %c84] : memref<64x144xbf16, #tpu.memory_space<vmem>>, vector<64x4xbf16>
    tpu.vector_store %arg5[%c0_25, %c84], %66 {strides = array<i32>} : memref<64x144xbf16, #tpu.memory_space<vmem>>, vector<64x4xbf16>,
    %68 = vector.extract_strided_slice %1 {offsets = [9, 1, 0], sizes = [4, 16, 4], strides = [1, 1, 1]} : vector<18x18x4xbf16> to vector<4x16x4xbf16>
    %69 = vector.shape_cast %68 : vector<4x16x4xbf16> to vector<64x4xbf16>
    %c0_26 = arith.constant 0 : index
    %c88 = arith.constant 88 : index
    %70 = vector.load %arg5[%c0_26, %c88] : memref<64x144xbf16, #tpu.memory_space<vmem>>, vector<64x4xbf16>
    tpu.vector_store %arg5[%c0_26, %c88], %69 {strides = array<i32>} : memref<64x144xbf16, #tpu.memory_space<vmem>>, vector<64x4xbf16>,
    %71 = vector.extract_strided_slice %1 {offsets = [9, 2, 0], sizes = [4, 16, 4], strides = [1, 1, 1]} : vector<18x18x4xbf16> to vector<4x16x4xbf16>
    %72 = vector.shape_cast %71 : vector<4x16x4xbf16> to vector<64x4xbf16>
    %c0_27 = arith.constant 0 : index
    %c92 = arith.constant 92 : index
    %73 = vector.load %arg5[%c0_27, %c92] : memref<64x144xbf16, #tpu.memory_space<vmem>>, vector<64x4xbf16>
    tpu.vector_store %arg5[%c0_27, %c92], %72 {strides = array<i32>} : memref<64x144xbf16, #tpu.memory_space<vmem>>, vector<64x4xbf16>,
    %74 = vector.extract_strided_slice %1 {offsets = [10, 0, 0], sizes = [4, 16, 4], strides = [1, 1, 1]} : vector<18x18x4xbf16> to vector<4x16x4xbf16>
    %75 = vector.shape_cast %74 : vector<4x16x4xbf16> to vector<64x4xbf16>
    %c0_28 = arith.constant 0 : index
    %c96 = arith.constant 96 : index
    %76 = vector.load %arg5[%c0_28, %c96] : memref<64x144xbf16, #tpu.memory_space<vmem>>, vector<64x4xbf16>
    tpu.vector_store %arg5[%c0_28, %c96], %75 {strides = array<i32>} : memref<64x144xbf16, #tpu.memory_space<vmem>>, vector<64x4xbf16>,
    %77 = vector.extract_strided_slice %1 {offsets = [10, 1, 0], sizes = [4, 16, 4], strides = [1, 1, 1]} : vector<18x18x4xbf16> to vector<4x16x4xbf16>
    %78 = vector.shape_cast %77 : vector<4x16x4xbf16> to vector<64x4xbf16>
    %c0_29 = arith.constant 0 : index
    %c100 = arith.constant 100 : index
    %79 = vector.load %arg5[%c0_29, %c100] : memref<64x144xbf16, #tpu.memory_space<vmem>>, vector<64x4xbf16>
    tpu.vector_store %arg5[%c0_29, %c100], %78 {strides = array<i32>} : memref<64x144xbf16, #tpu.memory_space<vmem>>, vector<64x4xbf16>,
    %80 = vector.extract_strided_slice %1 {offsets = [10, 2, 0], sizes = [4, 16, 4], strides = [1, 1, 1]} : vector<18x18x4xbf16> to vector<4x16x4xbf16>
    %81 = vector.shape_cast %80 : vector<4x16x4xbf16> to vector<64x4xbf16>
    %c0_30 = arith.constant 0 : index
    %c104 = arith.constant 104 : index
    %82 = vector.load %arg5[%c0_30, %c104] : memref<64x144xbf16, #tpu.memory_space<vmem>>, vector<64x4xbf16>
    tpu.vector_store %arg5[%c0_30, %c104], %81 {strides = array<i32>} : memref<64x144xbf16, #tpu.memory_space<vmem>>, vector<64x4xbf16>,
    %83 = vector.extract_strided_slice %1 {offsets = [12, 0, 0], sizes = [4, 16, 4], strides = [1, 1, 1]} : vector<18x18x4xbf16> to vector<4x16x4xbf16>
    %84 = vector.shape_cast %83 : vector<4x16x4xbf16> to vector<64x4xbf16>
    %c0_31 = arith.constant 0 : index
    %c108 = arith.constant 108 : index
    %85 = vector.load %arg5[%c0_31, %c108] : memref<64x144xbf16, #tpu.memory_space<vmem>>, vector<64x4xbf16>
    tpu.vector_store %arg5[%c0_31, %c108], %84 {strides = array<i32>} : memref<64x144xbf16, #tpu.memory_space<vmem>>, vector<64x4xbf16>,
    %86 = vector.extract_strided_slice %1 {offsets = [12, 1, 0], sizes = [4, 16, 4], strides = [1, 1, 1]} : vector<18x18x4xbf16> to vector<4x16x4xbf16>
    %87 = vector.shape_cast %86 : vector<4x16x4xbf16> to vector<64x4xbf16>
    %c0_32 = arith.constant 0 : index
    %c112 = arith.constant 112 : index
    %88 = vector.load %arg5[%c0_32, %c112] : memref<64x144xbf16, #tpu.memory_space<vmem>>, vector<64x4xbf16>
    tpu.vector_store %arg5[%c0_32, %c112], %87 {strides = array<i32>} : memref<64x144xbf16, #tpu.memory_space<vmem>>, vector<64x4xbf16>,
    %89 = vector.extract_strided_slice %1 {offsets = [12, 2, 0], sizes = [4, 16, 4], strides = [1, 1, 1]} : vector<18x18x4xbf16> to vector<4x16x4xbf16>
    %90 = vector.shape_cast %89 : vector<4x16x4xbf16> to vector<64x4xbf16>
    %c0_33 = arith.constant 0 : index
    %c116 = arith.constant 116 : index
    %91 = vector.load %arg5[%c0_33, %c116] : memref<64x144xbf16, #tpu.memory_space<vmem>>, vector<64x4xbf16>
    tpu.vector_store %arg5[%c0_33, %c116], %90 {strides = array<i32>} : memref<64x144xbf16, #tpu.memory_space<vmem>>, vector<64x4xbf16>,
    %92 = vector.extract_strided_slice %1 {offsets = [13, 0, 0], sizes = [4, 16, 4], strides = [1, 1, 1]} : vector<18x18x4xbf16> to vector<4x16x4xbf16>
    %93 = vector.shape_cast %92 : vector<4x16x4xbf16> to vector<64x4xbf16>
    %c0_34 = arith.constant 0 : index
    %c120 = arith.constant 120 : index
    %94 = vector.load %arg5[%c0_34, %c120] : memref<64x144xbf16, #tpu.memory_space<vmem>>, vector<64x4xbf16>
    tpu.vector_store %arg5[%c0_34, %c120], %93 {strides = array<i32>} : memref<64x144xbf16, #tpu.memory_space<vmem>>, vector<64x4xbf16>,
    %95 = vector.extract_strided_slice %1 {offsets = [13, 1, 0], sizes = [4, 16, 4], strides = [1, 1, 1]} : vector<18x18x4xbf16> to vector<4x16x4xbf16>
    %96 = vector.shape_cast %95 : vector<4x16x4xbf16> to vector<64x4xbf16>
    %c0_35 = arith.constant 0 : index
    %c124 = arith.constant 124 : index
    %97 = vector.load %arg5[%c0_35, %c124] : memref<64x144xbf16, #tpu.memory_space<vmem>>, vector<64x4xbf16>
    tpu.vector_store %arg5[%c0_35, %c124], %96 {strides = array<i32>} : memref<64x144xbf16, #tpu.memory_space<vmem>>, vector<64x4xbf16>,
    %98 = vector.extract_strided_slice %1 {offsets = [13, 2, 0], sizes = [4, 16, 4], strides = [1, 1, 1]} : vector<18x18x4xbf16> to vector<4x16x4xbf16>
    %99 = vector.shape_cast %98 : vector<4x16x4xbf16> to vector<64x4xbf16>
    %c0_36 = arith.constant 0 : index
    %c128 = arith.constant 128 : index
    %100 = vector.load %arg5[%c0_36, %c128] : memref<64x144xbf16, #tpu.memory_space<vmem>>, vector<64x4xbf16>
    tpu.vector_store %arg5[%c0_36, %c128], %99 {strides = array<i32>} : memref<64x144xbf16, #tpu.memory_space<vmem>>, vector<64x4xbf16>,
    %101 = vector.extract_strided_slice %1 {offsets = [14, 0, 0], sizes = [4, 16, 4], strides = [1, 1, 1]} : vector<18x18x4xbf16> to vector<4x16x4xbf16>
    %102 = vector.shape_cast %101 : vector<4x16x4xbf16> to vector<64x4xbf16>
    %c0_37 = arith.constant 0 : index
    %c132 = arith.constant 132 : index
    %103 = vector.load %arg5[%c0_37, %c132] : memref<64x144xbf16, #tpu.memory_space<vmem>>, vector<64x4xbf16>
    tpu.vector_store %arg5[%c0_37, %c132], %102 {strides = array<i32>} : memref<64x144xbf16, #tpu.memory_space<vmem>>, vector<64x4xbf16>,
    %104 = vector.extract_strided_slice %1 {offsets = [14, 1, 0], sizes = [4, 16, 4], strides = [1, 1, 1]} : vector<18x18x4xbf16> to vector<4x16x4xbf16>
    %105 = vector.shape_cast %104 : vector<4x16x4xbf16> to vector<64x4xbf16>
    %c0_38 = arith.constant 0 : index
    %c136 = arith.constant 136 : index
    %106 = vector.load %arg5[%c0_38, %c136] : memref<64x144xbf16, #tpu.memory_space<vmem>>, vector<64x4xbf16>
    tpu.vector_store %arg5[%c0_38, %c136], %105 {strides = array<i32>} : memref<64x144xbf16, #tpu.memory_space<vmem>>, vector<64x4xbf16>,
    %107 = vector.extract_strided_slice %1 {offsets = [14, 2, 0], sizes = [4, 16, 4], strides = [1, 1, 1]} : vector<18x18x4xbf16> to vector<4x16x4xbf16>
    %108 = vector.shape_cast %107 : vector<4x16x4xbf16> to vector<64x4xbf16>
    %c0_39 = arith.constant 0 : index
    %c140 = arith.constant 140 : index
    %109 = vector.load %arg5[%c0_39, %c140] : memref<64x144xbf16, #tpu.memory_space<vmem>>, vector<64x4xbf16>
    tpu.vector_store %arg5[%c0_39, %c140], %108 {strides = array<i32>} : memref<64x144xbf16, #tpu.memory_space<vmem>>, vector<64x4xbf16>,
    %c0_40 = arith.constant 0 : index
    %c0_41 = arith.constant 0 : index
    %110 = vector.load %arg5[%c0_40, %c0_41] : memref<64x144xbf16, #tpu.memory_space<vmem>>, vector<64x144xbf16>
    %c0_42 = arith.constant 0 : index
    %c0_43 = arith.constant 0 : index
    %111 = vector.load %arg2[%c0_42, %c0_43] : memref<144x128xbf16, #tpu.memory_space<vmem>>, vector<144x128xbf16>
    %cst = arith.constant dense<0.000000e+00> : vector<64x128xf32>
    %112 = tpu.matmul %110, %111, %cst {dimension_numbers = #tpu.dot_dimension_numbers<[1], [0], [0], [1], [0, 0, 1, 1], [], []>} : vector<64x144xbf16>, vector<144x128xbf16>, vector<64x128xf32> -> vector<64x128xf32>
    %cst_44 = arith.constant dense<0.000000e+00> : vector<128xf32>
    %113 = vector.multi_reduction <add>, %112, %cst_44 [0] : vector<64x128xf32> to vector<128xf32>
    %114 = vector.shape_cast %113 : vector<128xf32> to vector<1x128xf32>
    %115 = vector.shape_cast %114 : vector<1x128xf32> to vector<1x1x128xf32>
    %c0_45 = arith.constant 0 : index
    %c0_46 = arith.constant 0 : index
    %c0_47 = arith.constant 0 : index
    %116 = vector.load %arg4[%c0_45, %c0_46, %c0_47] : memref<1x2x128xf32, #tpu.memory_space<vmem>>, vector<1x1x128xf32>
    tpu.vector_store %arg4[%c0_45, %c0_46, %c0_47], %115 {strides = array<i32>} : memref<1x2x128xf32, #tpu.memory_space<vmem>>, vector<1x1x128xf32>,
    %117 = arith.mulf %112, %112 : vector<64x128xf32>
    %cst_48 = arith.constant dense<0.000000e+00> : vector<128xf32>
    %118 = vector.multi_reduction <add>, %117, %cst_48 [0] : vector<64x128xf32> to vector<128xf32>
    %119 = vector.shape_cast %118 : vector<128xf32> to vector<1x128xf32>
    %120 = vector.shape_cast %119 : vector<1x128xf32> to vector<1x1x128xf32>
    %c0_49 = arith.constant 0 : index
    %c1 = arith.constant 1 : index
    %c0_50 = arith.constant 0 : index
    %121 = vector.load %arg4[%c0_49, %c1, %c0_50] : memref<1x2x128xf32, #tpu.memory_space<vmem>>, vector<1x1x128xf32>
    tpu.vector_store %arg4[%c0_49, %c1, %c0_50], %120 {strides = array<i32>} : memref<1x2x128xf32, #tpu.memory_space<vmem>>, vector<1x1x128xf32>,
    %122 = vector.shape_cast %112 : vector<64x128xf32> to vector<1x64x128xf32>
    %123 = arith.truncf %122 : vector<1x64x128xf32> to vector<1x64x128xbf16>
    %c0_51 = arith.constant 0 : index
    %c0_52 = arith.constant 0 : index
    %c0_53 = arith.constant 0 : index
    %124 = vector.load %arg3[%c0_51, %c0_52, %c0_53] : memref<1x64x128xbf16, #tpu.memory_space<vmem>>, vector<1x64x128xbf16>
    tpu.vector_store %arg3[%c0_51, %c0_52, %c0_53], %123 {strides = array<i32>} : memref<1x64x128xbf16, #tpu.memory_space<vmem>>, vector<1x64x128xbf16>,
    return
  }
  func.func @transform_0(%arg0: i32) -> (i32, i32, i32, i32) {
    %c0_i32 = arith.constant 0 : i32
    %c0_i32_0 = arith.constant 0 : i32
    %c0_i32_1 = arith.constant 0 : i32
    %c0_i32_2 = arith.constant 0 : i32
    return %arg0, %c0_i32, %c0_i32_0, %c0_i32_1 : i32, i32, i32, i32
  }
  func.func @transform_1(%arg0: i32) -> (i32, i32) {
    %c0_i32 = arith.constant 0 : i32
    %c0_i32_0 = arith.constant 0 : i32
    %c0_i32_1 = arith.constant 0 : i32
    return %c0_i32, %c0_i32_0 : i32, i32
  }
  func.func @transform_2(%arg0: i32) -> (i32, i32, i32) {
    %c0_i32 = arith.constant 0 : i32
    %c0_i32_0 = arith.constant 0 : i32
    %c0_i32_1 = arith.constant 0 : i32
    return %arg0, %c0_i32, %c0_i32_0 : i32, i32, i32
  }
  func.func @transform_3(%arg0: i32) -> (i32, i32, i32) {
    %c0_i32 = arith.constant 0 : i32
    %c0_i32_0 = arith.constant 0 : i32
    %c0_i32_1 = arith.constant 0 : i32
    return %arg0, %c0_i32, %c0_i32_0 : i32, i32, i32
  }
}

module attributes {stable_mosaic.version = 11 : i64} {
  func.func @bn_lrelu_kernel(%arg0: i32, %arg1: i32, %arg2: memref<1x64x128xbf16, #tpu.memory_space<vmem>>, %arg3: memref<1x128xf32, #tpu.memory_space<vmem>>, %arg4: memref<1x128xf32, #tpu.memory_space<vmem>>, %arg5: memref<1x64x128xf32, #tpu.memory_space<vmem>>) attributes {dimension_semantics = [#tpu.dimension_semantics<parallel>, #tpu.dimension_semantics<parallel>], iteration_bounds = array<i64: 2, 1>, scalar_prefetch = 0 : i64, scratch_operands = 0 : i64, tpu.core_type = #tpu.core_type<tc>, window_params = [{transform_indices = @transform_0, window_bounds = array<i64: 1, 64, 128>}, {pipeline_mode = #tpu.pipeline_mode<synchronous>, transform_indices = @transform_1, window_bounds = array<i64: 1, 128>}, {pipeline_mode = #tpu.pipeline_mode<synchronous>, transform_indices = @transform_2, window_bounds = array<i64: 1, 128>}, {transform_indices = @transform_3, window_bounds = array<i64: 1, 64, 128>}]} {
    %c0 = arith.constant 0 : index
    %c0_0 = arith.constant 0 : index
    %c0_1 = arith.constant 0 : index
    %0 = vector.load %arg2[%c0, %c0_0, %c0_1] : memref<1x64x128xbf16, #tpu.memory_space<vmem>>, vector<1x64x128xbf16>
    %1 = arith.extf %0 : vector<1x64x128xbf16> to vector<1x64x128xf32>
    %c0_2 = arith.constant 0 : index
    %c0_3 = arith.constant 0 : index
    %2 = vector.load %arg3[%c0_2, %c0_3] : memref<1x128xf32, #tpu.memory_space<vmem>>, vector<1x128xf32>
    %3 = vector.shape_cast %2 : vector<1x128xf32> to vector<1x1x128xf32>
    %4 = vector.broadcast %3 : vector<1x1x128xf32> to vector<1x64x128xf32>
    %5 = arith.mulf %1, %4 : vector<1x64x128xf32>
    %c0_4 = arith.constant 0 : index
    %c0_5 = arith.constant 0 : index
    %6 = vector.load %arg4[%c0_4, %c0_5] : memref<1x128xf32, #tpu.memory_space<vmem>>, vector<1x128xf32>
    %7 = vector.shape_cast %6 : vector<1x128xf32> to vector<1x1x128xf32>
    %8 = vector.broadcast %7 : vector<1x1x128xf32> to vector<1x64x128xf32>
    %9 = arith.addf %5, %8 : vector<1x64x128xf32>
    %cst = arith.constant 0.000000e+00 : f32
    %10 = vector.broadcast %cst : f32 to vector<1x64x128xf32>
    %11 = arith.cmpf oge, %9, %10 : vector<1x64x128xf32>
    %cst_6 = arith.constant 0.00999999977 : f32
    %12 = vector.broadcast %cst_6 : f32 to vector<1x64x128xf32>
    %13 = arith.mulf %12, %9 : vector<1x64x128xf32>
    %14 = arith.select %11, %9, %13 : vector<1x64x128xi1>, vector<1x64x128xf32>
    %c0_7 = arith.constant 0 : index
    %c0_8 = arith.constant 0 : index
    %c0_9 = arith.constant 0 : index
    %15 = vector.load %arg5[%c0_7, %c0_8, %c0_9] : memref<1x64x128xf32, #tpu.memory_space<vmem>>, vector<1x64x128xf32>
    tpu.vector_store %arg5[%c0_7, %c0_8, %c0_9], %14 {strides = array<i32>} : memref<1x64x128xf32, #tpu.memory_space<vmem>>, vector<1x64x128xf32>,
    return
  }
  func.func @transform_0(%arg0: i32, %arg1: i32) -> (i32, i32, i32) {
    %c0_i32 = arith.constant 0 : i32
    %c0_i32_0 = arith.constant 0 : i32
    return %arg0, %arg1, %c0_i32 : i32, i32, i32
  }
  func.func @transform_1(%arg0: i32, %arg1: i32) -> (i32, i32) {
    %c0_i32 = arith.constant 0 : i32
    %c0_i32_0 = arith.constant 0 : i32
    %c0_i32_1 = arith.constant 0 : i32
    return %c0_i32, %c0_i32_0 : i32, i32
  }
  func.func @transform_2(%arg0: i32, %arg1: i32) -> (i32, i32) {
    %c0_i32 = arith.constant 0 : i32
    %c0_i32_0 = arith.constant 0 : i32
    %c0_i32_1 = arith.constant 0 : i32
    return %c0_i32, %c0_i32_0 : i32, i32
  }
  func.func @transform_3(%arg0: i32, %arg1: i32) -> (i32, i32, i32) {
    %c0_i32 = arith.constant 0 : i32
    %c0_i32_0 = arith.constant 0 : i32
    return %arg0, %arg1, %c0_i32 : i32, i32, i32
  }
}

</mosaic_0001>

<llo_original>
// kernel: mul.4
$region0: #{mul.4}
  %s0 = inlined_call_operand.vmem [shape: f32[3,3,4,4,8], index: 0, kind: input, shape index: {}]
  %s1 = inlined_call_operand.vmem [shape: f32[36,32], index: 1, kind: output, shape index: {}]
  $region1: #{mul.4} parent=0
    #allocation0 [shape = 'u8[147456]{0}', space=vmem, size = 0x24000, scoped, tag = 'scoped mem for input reshape']
    %s3 = sshllo.u32 0, 4
    %s4 = smul.addr 4, 35
    %s5 = scalar_lea.vmem %s0, %s4
    %v6 = vld [vmem:[%s5] sm:%s3]
    %s7 = scalar_lea.vmem [#allocation0], 280
    %8 = vst [vmem:[%s7] sm:%s3] %v6
    %s9 = smul.addr 4, 34
    %s10 = scalar_lea.vmem %s0, %s9
    %v11 = vld [vmem:[%s10] sm:%s3]
    %s12 = scalar_lea.vmem [#allocation0], 272
    %13 = vst [vmem:[%s12] sm:%s3] %v11
    %s14 = smul.addr 4, 33
    %s15 = scalar_lea.vmem %s0, %s14
    %v16 = vld [vmem:[%s15] sm:%s3]
    %s17 = scalar_lea.vmem [#allocation0], 264
    %18 = vst [vmem:[%s17] sm:%s3] %v16
    %s19 = smul.addr 4, 32
    %s20 = scalar_lea.vmem %s0, %s19
    %v21 = vld [vmem:[%s20] sm:%s3]
    %s22 = scalar_lea.vmem [#allocation0], 256
    %23 = vst [vmem:[%s22] sm:%s3] %v21
    %s24 = smul.addr 4, 31
    %s25 = scalar_lea.vmem %s0, %s24
    %v26 = vld [vmem:[%s25] sm:%s3]
    %s27 = scalar_lea.vmem [#allocation0], 248
    %28 = vst [vmem:[%s27] sm:%s3] %v26
    %s29 = smul.addr 4, 30
    %s30 = scalar_lea.vmem %s0, %s29
    %v31 = vld [vmem:[%s30] sm:%s3]
    %s32 = scalar_lea.vmem [#allocation0], 240
    %33 = vst [vmem:[%s32] sm:%s3] %v31
    %s34 = smul.addr 4, 29
    %s35 = scalar_lea.vmem %s0, %s34
    %v36 = vld [vmem:[%s35] sm:%s3]
    %s37 = scalar_lea.vmem [#allocation0], 232
    %38 = vst [vmem:[%s37] sm:%s3] %v36
    %s39 = smul.addr 4, 28
    %s40 = scalar_lea.vmem %s0, %s39
    %v41 = vld [vmem:[%s40] sm:%s3]
    %s42 = scalar_lea.vmem [#allocation0], 224
    %43 = vst [vmem:[%s42] sm:%s3] %v41
    %s44 = smul.addr 4, 27
    %s45 = scalar_lea.vmem %s0, %s44
    %v46 = vld [vmem:[%s45] sm:%s3]
    %s47 = scalar_lea.vmem [#allocation0], 216
    %48 = vst [vmem:[%s47] sm:%s3] %v46
    %s49 = smul.addr 4, 26
    %s50 = scalar_lea.vmem %s0, %s49
    %v51 = vld [vmem:[%s50] sm:%s3]
    %s52 = scalar_lea.vmem [#allocation0], 208
    %53 = vst [vmem:[%s52] sm:%s3] %v51
    %s54 = smul.addr 4, 25
    %s55 = scalar_lea.vmem %s0, %s54
    %v56 = vld [vmem:[%s55] sm:%s3]
    %s57 = scalar_lea.vmem [#allocation0], 200
    %58 = vst [vmem:[%s57] sm:%s3] %v56
    %s59 = smul.addr 4, 24
    %s60 = scalar_lea.vmem %s0, %s59
    %v61 = vld [vmem:[%s60] sm:%s3]
    %s62 = scalar_lea.vmem [#allocation0], 192
    %63 = vst [vmem:[%s62] sm:%s3] %v61
    %s64 = smul.addr 4, 23
    %s65 = scalar_lea.vmem %s0, %s64
    %v66 = vld [vmem:[%s65] sm:%s3]
    %s67 = scalar_lea.vmem [#allocation0], 184
    %68 = vst [vmem:[%s67] sm:%s3] %v66
    %s69 = smul.addr 4, 22
    %s70 = scalar_lea.vmem %s0, %s69
    %v71 = vld [vmem:[%s70] sm:%s3]
    %s72 = scalar_lea.vmem [#allocation0], 176
    %73 = vst [vmem:[%s72] sm:%s3] %v71
    %s74 = smul.addr 4, 21
    %s75 = scalar_lea.vmem %s0, %s74
    %v76 = vld [vmem:[%s75] sm:%s3]
    %s77 = scalar_lea.vmem [#allocation0], 168
    %78 = vst [vmem:[%s77] sm:%s3] %v76
    %s79 = smul.addr 4, 20
    %s80 = scalar_lea.vmem %s0, %s79
    %v81 = vld [vmem:[%s80] sm:%s3]
    %s82 = scalar_lea.vmem [#allocation0], 160
    %83 = vst [vmem:[%s82] sm:%s3] %v81
    %s84 = smul.addr 4, 19
    %s85 = scalar_lea.vmem %s0, %s84
    %v86 = vld [vmem:[%s85] sm:%s3]
    %s87 = scalar_lea.vmem [#allocation0], 152
    %88 = vst [vmem:[%s87] sm:%s3] %v86
    %s89 = smul.addr 4, 18
    %s90 = scalar_lea.vmem %s0, %s89
    %v91 = vld [vmem:[%s90] sm:%s3]
    %s92 = scalar_lea.vmem [#allocation0], 144
    %93 = vst [vmem:[%s92] sm:%s3] %v91
    %s94 = smul.addr 4, 17
    %s95 = scalar_lea.vmem %s0, %s94
    %v96 = vld [vmem:[%s95] sm:%s3]
    %s97 = scalar_lea.vmem [#allocation0], 136
    %98 = vst [vmem:[%s97] sm:%s3] %v96
    %s99 = smul.addr 4, 16
    %s100 = scalar_lea.vmem %s0, %s99
    %v101 = vld [vmem:[%s100] sm:%s3]
    %s102 = scalar_lea.vmem [#allocation0], 128
    %103 = vst [vmem:[%s102] sm:%s3] %v101
    %s104 = smul.addr 4, 15
    %s105 = scalar_lea.vmem %s0, %s104
    %v106 = vld [vmem:[%s105] sm:%s3]
    %s107 = scalar_lea.vmem [#allocation0], 120
    %108 = vst [vmem:[%s107] sm:%s3] %v106
    %s109 = smul.addr 4, 14
    %s110 = scalar_lea.vmem %s0, %s109
    %v111 = vld [vmem:[%s110] sm:%s3]
    %s112 = scalar_lea.vmem [#allocation0], 112
    %113 = vst [vmem:[%s112] sm:%s3] %v111
    %s114 = smul.addr 4, 13
    %s115 = scalar_lea.vmem %s0, %s114
    %v116 = vld [vmem:[%s115] sm:%s3]
    %s117 = scalar_lea.vmem [#allocation0], 104
    %118 = vst [vmem:[%s117] sm:%s3] %v116
    %s119 = smul.addr 4, 12
    %s120 = scalar_lea.vmem %s0, %s119
    %v121 = vld [vmem:[%s120] sm:%s3]
    %s122 = scalar_lea.vmem [#allocation0], 96
    %123 = vst [vmem:[%s122] sm:%s3] %v121
    %s124 = smul.addr 4, 11
    %s125 = scalar_lea.vmem %s0, %s124
    %v126 = vld [vmem:[%s125] sm:%s3]
    %s127 = scalar_lea.vmem [#allocation0], 88
    %128 = vst [vmem:[%s127] sm:%s3] %v126
    %s129 = smul.addr 4, 10
    %s130 = scalar_lea.vmem %s0, %s129
    %v131 = vld [vmem:[%s130] sm:%s3]
    %s132 = scalar_lea.vmem [#allocation0], 80
    %133 = vst [vmem:[%s132] sm:%s3] %v131
    %s134 = smul.addr 4, 9
    %s135 = scalar_lea.vmem %s0, %s134
    %v136 = vld [vmem:[%s135] sm:%s3]
    %s137 = scalar_lea.vmem [#allocation0], 72
    %138 = vst [vmem:[%s137] sm:%s3] %v136
    %s139 = smul.addr 4, 8
    %s140 = scalar_lea.vmem %s0, %s139
    %v141 = vld [vmem:[%s140] sm:%s3]
    %s142 = scalar_lea.vmem [#allocation0], 64
    %143 = vst [vmem:[%s142] sm:%s3] %v141
    %s144 = smul.addr 4, 7
    %s145 = scalar_lea.vmem %s0, %s144
    %v146 = vld [vmem:[%s145] sm:%s3]
    %s147 = scalar_lea.vmem [#allocation0], 56
    %148 = vst [vmem:[%s147] sm:%s3] %v146
    %s149 = smul.addr 4, 6
    %s150 = scalar_lea.vmem %s0, %s149
    %v151 = vld [vmem:[%s150] sm:%s3]
    %s152 = scalar_lea.vmem [#allocation0], 48
    %153 = vst [vmem:[%s152] sm:%s3] %v151
    %s154 = smul.addr 4, 5
    %s155 = scalar_lea.vmem %s0, %s154
    %v156 = vld [vmem:[%s155] sm:%s3]
    %s157 = scalar_lea.vmem [#allocation0], 40
    %158 = vst [vmem:[%s157] sm:%s3] %v156
    %s159 = smul.addr 4, 4
    %s160 = scalar_lea.vmem %s0, %s159
    %v161 = vld [vmem:[%s160] sm:%s3]
    %s162 = scalar_lea.vmem [#allocation0], 32
    %163 = vst [vmem:[%s162] sm:%s3] %v161
    %s164 = smul.addr 4, 3
    %s165 = scalar_lea.vmem %s0, %s164
    %v166 = vld [vmem:[%s165] sm:%s3]
    %s167 = scalar_lea.vmem [#allocation0], 24
    %168 = vst [vmem:[%s167] sm:%s3] %v166
    %s169 = smul.addr 4, 2
    %s170 = scalar_lea.vmem %s0, %s169
    %v171 = vld [vmem:[%s170] sm:%s3]
    %s172 = scalar_lea.vmem [#allocation0], 16
    %173 = vst [vmem:[%s172] sm:%s3] %v171
    %s174 = scalar_lea.vmem %s0, 4
    %v175 = vld [vmem:[%s174] sm:%s3]
    %s176 = scalar_lea.vmem [#allocation0], 8
    %177 = vst [vmem:[%s176] sm:%s3] %v175
    %v178 = vld [vmem:[%s0] sm:%s3]
    %179 = vst [vmem:[#allocation0] sm:%s3] %v178
    %v180 = vld [vmem:[#allocation0] ss:$8 sm:$0xf]
    %v181 = vld [vmem:[#allocation0] ss:$8 sm:$0xf0]
    %vm182 = vcmask 1047556
    %v183 = vsel %vm182, %v181, %v180
    %vm184 = vcmask 64512
    %185 = vst.msk [vmem:[%s1] sm:$0xff] %vm184, %v183
    %s186 = scalar_lea.vmem [#allocation0], 64
    %v187 = vld [vmem:[%s186] ss:$8 sm:$0xf]
    %s188 = scalar_lea.vmem [#allocation0], 64
    %v189 = vld [vmem:[%s188] ss:$8 sm:$0xf0]
    %vm190 = vcmask 1047556
    %v191 = vsel %vm190, %v189, %v187
    %vm192 = vcmask 64512
    %s193 = scalar_lea.vmem %s1, 8
    %194 = vst.msk [vmem:[%s193] sm:$0xff] %vm192, %v191
    %s195 = scalar_lea.vmem [#allocation0], 128
    %v196 = vld [vmem:[%s195] ss:$8 sm:$0xf]
    %s197 = scalar_lea.vmem [#allocation0], 128
    %v198 = vld [vmem:[%s197] ss:$8 sm:$0xf0]
    %vm199 = vcmask 1047556
    %v200 = vsel %vm199, %v198, %v196
    %vm201 = vcmask 64512
    %s202 = scalar_lea.vmem %s1, 16
    %203 = vst.msk [vmem:[%s202] sm:$0xff] %vm201, %v200
    %s204 = scalar_lea.vmem [#allocation0], 192
    %v205 = vld [vmem:[%s204] ss:$8 sm:$0xf]
    %s206 = scalar_lea.vmem [#allocation0], 192
    %v207 = vld [vmem:[%s206] ss:$8 sm:$0xf0]
    %vm208 = vcmask 1047556
    %v209 = vsel %vm208, %v207, %v205
    %vm210 = vcmask 64512
    %s211 = scalar_lea.vmem %s1, 24
    %212 = vst.msk [vmem:[%s211] sm:$0xff] %vm210, %v209
    %s213 = scalar_lea.vmem [#allocation0], 256
    %v214 = vld [vmem:[%s213] ss:$8 sm:$0xf]
    %vm215 = vcmask 64512
    %s216 = scalar_lea.vmem %s1, 32
    %217 = vst.msk [vmem:[%s216] sm:$0xf] %vm215, %v214
    %s218 = scalar_lea.vmem [#allocation0], 3
    %v219 = vld [vmem:[%s218] ss:$8 sm:$0xf]
    %s220 = scalar_lea.vmem [#allocation0], 3
    %v221 = vld [vmem:[%s220] ss:$8 sm:$0xf0]
    %vm222 = vcmask 1047556
    %v223 = vsel %vm222, %v221, %v219
    %224 = vrot.lane.b32.xlu0 %v223, 24
    %v225 = vpop.permute.xlu0 %224
    %vm226 = vcmask 261312
    %227 = vst.msk [vmem:[%s1] sm:$0xff] %vm226, %v225
    %s228 = scalar_lea.vmem [#allocation0], 259
    %v229 = vld [vmem:[%s228] ss:$8 sm:$0xf]
    %s230 = scalar_lea.vmem [#allocation0], 35
    %v231 = vld [vmem:[%s230] ss:$8 sm:$0xf0]
    %vm232 = vcmask 1047556
    %v233 = vsel %vm232, %v231, %v229
    %234 = vrot.lane.b32.xlu0 %v233, 24
    %v235 = vpop.permute.xlu0 %234
    %vm236 = vcmask 261312
    %s237 = scalar_lea.vmem %s1, 32
    %238 = vst.msk [vmem:[%s237] sm:$0xf] %vm236, %v235
    %s239 = scalar_lea.vmem %s1, 4
    %240 = vst.msk [vmem:[%s239] sm:$0xf0] %vm236, %v235
    %s241 = scalar_lea.vmem [#allocation0], 99
    %v242 = vld [vmem:[%s241] ss:$8 sm:$0xf]
    %s243 = scalar_lea.vmem [#allocation0], 99
    %v244 = vld [vmem:[%s243] ss:$8 sm:$0xf0]
    %vm245 = vcmask 1047556
    %v246 = vsel %vm245, %v244, %v242
    %247 = vrot.lane.b32.xlu0 %v246, 24
    %v248 = vpop.permute.xlu0 %247
    %vm249 = vcmask 261312
    %s250 = scalar_lea.vmem %s1, 12
    %251 = vst.msk [vmem:[%s250] sm:$0xff] %vm249, %v248
    %s252 = scalar_lea.vmem [#allocation0], 163
    %v253 = vld [vmem:[%s252] ss:$8 sm:$0xf]
    %s254 = scalar_lea.vmem [#allocation0], 163
    %v255 = vld [vmem:[%s254] ss:$8 sm:$0xf0]
    %vm256 = vcmask 1047556
    %v257 = vsel %vm256, %v255, %v253
    %258 = vrot.lane.b32.xlu0 %v257, 24
    %v259 = vpop.permute.xlu0 %258
    %vm260 = vcmask 261312
    %s261 = scalar_lea.vmem %s1, 20
    %262 = vst.msk [vmem:[%s261] sm:$0xff] %vm260, %v259
    %s263 = scalar_lea.vmem [#allocation0], 227
    %v264 = vld [vmem:[%s263] ss:$8 sm:$0xf]
    %265 = vrot.lane.b32.xlu0 %v264, 24
    %v266 = vpop.permute.xlu0 %265
    %vm267 = vcmask 261312
    %s268 = scalar_lea.vmem %s1, 28
    %269 = vst.msk [vmem:[%s268] sm:$0xf] %vm267, %v266
    %s270 = scalar_lea.vmem [#allocation0], 2
    %v271 = vld [vmem:[%s270] ss:$8 sm:$0xf]
    %s272 = scalar_lea.vmem [#allocation0], 2
    %v273 = vld [vmem:[%s272] ss:$8 sm:$0xf0]
    %vm274 = vcmask 1047556
    %v275 = vsel %vm274, %v273, %v271
    %276 = vrot.lane.b32.xlu0 %v275, 16
    %v277 = vpop.permute.xlu0 %276
    %vm278 = vcmask 195712
    %279 = vst.msk [vmem:[%s1] sm:$0xff] %vm278, %v277
    %s280 = scalar_lea.vmem [#allocation0], 258
    %v281 = vld [vmem:[%s280] ss:$8 sm:$0xf]
    %s282 = scalar_lea.vmem [#allocation0], 34
    %v283 = vld [vmem:[%s282] ss:$8 sm:$0xf0]
    %vm284 = vcmask 1047556
    %v285 = vsel %vm284, %v283, %v281
    %286 = vrot.lane.b32.xlu0 %v285, 16
    %v287 = vpop.permute.xlu0 %286
    %vm288 = vcmask 195712
    %s289 = scalar_lea.vmem %s1, 32
    %290 = vst.msk [vmem:[%s289] sm:$0xf] %vm288, %v287
    %s291 = scalar_lea.vmem %s1, 4
    %292 = vst.msk [vmem:[%s291] sm:$0xf0] %vm288, %v287
    %s293 = scalar_lea.vmem [#allocation0], 98
    %v294 = vld [vmem:[%s293] ss:$8 sm:$0xf]
    %s295 = scalar_lea.vmem [#allocation0], 98
    %v296 = vld [vmem:[%s295] ss:$8 sm:$0xf0]
    %vm297 = vcmask 1047556
    %v298 = vsel %vm297, %v296, %v294
    %299 = vrot.lane.b32.xlu0 %v298, 16
    %v300 = vpop.permute.xlu0 %299
    %vm301 = vcmask 195712
    %s302 = scalar_lea.vmem %s1, 12
    %303 = vst.msk [vmem:[%s302] sm:$0xff] %vm301, %v300
    %s304 = scalar_lea.vmem [#allocation0], 162
    %v305 = vld [vmem:[%s304] ss:$8 sm:$0xf]
    %s306 = scalar_lea.vmem [#allocation0], 162
    %v307 = vld [vmem:[%s306] ss:$8 sm:$0xf0]
    %vm308 = vcmask 1047556
    %v309 = vsel %vm308, %v307, %v305
    %310 = vrot.lane.b32.xlu0 %v309, 16
    %v311 = vpop.permute.xlu0 %310
    %vm312 = vcmask 195712
    %s313 = scalar_lea.vmem %s1, 20
    %314 = vst.msk [vmem:[%s313] sm:$0xff] %vm312, %v311
    %s315 = scalar_lea.vmem [#allocation0], 226
    %v316 = vld [vmem:[%s315] ss:$8 sm:$0xf]
    %317 = vrot.lane.b32.xlu0 %v316, 16
    %v318 = vpop.permute.xlu0 %317
    %vm319 = vcmask 195712
    %s320 = scalar_lea.vmem %s1, 28
    %321 = vst.msk [vmem:[%s320] sm:$0xf] %vm319, %v318
    %s322 = scalar_lea.vmem [#allocation0], 1
    %v323 = vld [vmem:[%s322] ss:$8 sm:$0xf]
    %s324 = scalar_lea.vmem [#allocation0], 1
    %v325 = vld [vmem:[%s324] ss:$8 sm:$0xf0]
    %vm326 = vcmask 1047556
    %v327 = vsel %vm326, %v325, %v323
    %328 = vrot.lane.b32.xlu0 %v327, 8
    %v329 = vpop.permute.xlu0 %328
    %vm330 = vcmask 130112
    %331 = vst.msk [vmem:[%s1] sm:$0xff] %vm330, %v329
    %s332 = scalar_lea.vmem [#allocation0], 257
    %v333 = vld [vmem:[%s332] ss:$8 sm:$0xf]
    %s334 = scalar_lea.vmem [#allocation0], 33
    %v335 = vld [vmem:[%s334] ss:$8 sm:$0xf0]
    %vm336 = vcmask 1047556
    %v337 = vsel %vm336, %v335, %v333
    %338 = vrot.lane.b32.xlu0 %v337, 8
    %v339 = vpop.permute.xlu0 %338
    %vm340 = vcmask 130112
    %s341 = scalar_lea.vmem %s1, 32
    %342 = vst.msk [vmem:[%s341] sm:$0xf] %vm340, %v339
    %s343 = scalar_lea.vmem %s1, 4
    %344 = vst.msk [vmem:[%s343] sm:$0xf0] %vm340, %v339
    %s345 = scalar_lea.vmem [#allocation0], 97
    %v346 = vld [vmem:[%s345] ss:$8 sm:$0xf]
    %s347 = scalar_lea.vmem [#allocation0], 97
    %v348 = vld [vmem:[%s347] ss:$8 sm:$0xf0]
    %vm349 = vcmask 1047556
    %v350 = vsel %vm349, %v348, %v346
    %351 = vrot.lane.b32.xlu0 %v350, 8
    %v352 = vpop.permute.xlu0 %351
    %vm353 = vcmask 130112
    %s354 = scalar_lea.vmem %s1, 12
    %355 = vst.msk [vmem:[%s354] sm:$0xff] %vm353, %v352
    %s356 = scalar_lea.vmem [#allocation0], 161
    %v357 = vld [vmem:[%s356] ss:$8 sm:$0xf]
    %s358 = scalar_lea.vmem [#allocation0], 161
    %v359 = vld [vmem:[%s358] ss:$8 sm:$0xf0]
    %vm360 = vcmask 1047556
    %v361 = vsel %vm360, %v359, %v357
    %362 = vrot.lane.b32.xlu0 %v361, 8
    %v363 = vpop.permute.xlu0 %362
    %vm364 = vcmask 130112
    %s365 = scalar_lea.vmem %s1, 20
    %366 = vst.msk [vmem:[%s365] sm:$0xff] %vm364, %v363
    %s367 = scalar_lea.vmem [#allocation0], 225
    %v368 = vld [vmem:[%s367] ss:$8 sm:$0xf]
    %369 = vrot.lane.b32.xlu0 %v368, 8
    %v370 = vpop.permute.xlu0 %369
    %vm371 = vcmask 130112
    %s372 = scalar_lea.vmem %s1, 28
    %373 = vst.msk [vmem:[%s372] sm:$0xf] %vm371, %v370

// kernel: tile.18
$region0: #{tile.18}
  #allocation0 [shape = 's32[1]{0}', space=sflag, size = 0x4, scoped, tag = 'scoped memory for tile.18']
  %s0 = inlined_call_operand.vmem [shape: f32[8], index: 0, kind: input, shape index: {}]
  %s1 = inlined_call_operand.vmem [shape: f32[16,8], index: 1, kind: output, shape index: {}]
  // Predicated region
  $region2: #{tile.18} parent=0 // pred_check
    _
  $region3: #{tile.18} parent=0 // pred_check_branch
    %3 = sbr.rel (0) target = $region5
  $region4: #{tile.18} parent=0 // pred_region
    _
  $region5: #{tile.18} parent=0 // pred_fallthru
    _
  %v4 = vld [vmem:[%s0] ss:$0 sm:$0xff]
  %5 = vst [vmem:[%s1] sm:$0xff] %v4
  %s6 = scalar_lea.vmem %s1, 8
  %7 = vst [vmem:[%s6] sm:$0xff] %v4

// kernel: tile.19
$region0: #{tile.19}
  %s0 = inlined_call_operand.vmem [shape: f32[16,8], index: 0, kind: input, shape index: {}]
  %s1 = inlined_call_operand.vmem [shape: f32[1,128], index: 1, kind: output, shape index: {}]
  $region1: #{tile.19} parent=0
    #allocation0 [shape = 'u8[4096]{0}', space=vmem, size = 0x1000, scoped, tag = 'scoped mem for output reshape']
    %v2 = vld [vmem:[%s0] sm:$0x1]
    %vm3 = vcmask 64512
    %4 = vst.msk [vmem:[#allocation0] sm:$0x1] %vm3, %v2
    %s5 = scalar_lea.vmem %s0, 15
    %v6 = vld [vmem:[%s5] sm:$0x1]
    %7 = vrot.lane.b32.xlu0 %v6, 120
    %v8 = vpop.permute.xlu0 %7
    %vm9 = vcmask 1048512
    %10 = vst.msk [vmem:[#allocation0] sm:$0x1] %vm9, %v8
    %s11 = scalar_lea.vmem %s0, 14
    %v12 = vld [vmem:[%s11] sm:$0x1]
    %13 = vrot.lane.b32.xlu0 %v12, 112
    %v14 = vpop.permute.xlu0 %13
    %vm15 = vcmask 982912
    %16 = vst.msk [vmem:[#allocation0] sm:$0x1] %vm15, %v14
    %s17 = scalar_lea.vmem %s0, 13
    %v18 = vld [vmem:[%s17] sm:$0x1]
    %19 = vrot.lane.b32.xlu0 %v18, 104
    %v20 = vpop.permute.xlu0 %19
    %vm21 = vcmask 917312
    %22 = vst.msk [vmem:[#allocation0] sm:$0x1] %vm21, %v20
    %s23 = scalar_lea.vmem %s0, 12
    %v24 = vld [vmem:[%s23] sm:$0x1]
    %25 = vrot.lane.b32.xlu0 %v24, 96
    %v26 = vpop.permute.xlu0 %25
    %vm27 = vcmask 851712
    %28 = vst.msk [vmem:[#allocation0] sm:$0x1] %vm27, %v26
    %s29 = scalar_lea.vmem %s0, 11
    %v30 = vld [vmem:[%s29] sm:$0x1]
    %31 = vrot.lane.b32.xlu0 %v30, 88
    %v32 = vpop.permute.xlu0 %31
    %vm33 = vcmask 786112
    %34 = vst.msk [vmem:[#allocation0] sm:$0x1] %vm33, %v32
    %s35 = scalar_lea.vmem %s0, 10
    %v36 = vld [vmem:[%s35] sm:$0x1]
    %37 = vrot.lane.b32.xlu0 %v36, 80
    %v38 = vpop.permute.xlu0 %37
    %vm39 = vcmask 720512
    %40 = vst.msk [vmem:[#allocation0] sm:$0x1] %vm39, %v38
    %s41 = scalar_lea.vmem %s0, 9
    %v42 = vld [vmem:[%s41] sm:$0x1]
    %43 = vrot.lane.b32.xlu0 %v42, 72
    %v44 = vpop.permute.xlu0 %43
    %vm45 = vcmask 654912
    %46 = vst.msk [vmem:[#allocation0] sm:$0x1] %vm45, %v44
    %s47 = scalar_lea.vmem %s0, 8
    %v48 = vld [vmem:[%s47] sm:$0x1]
    %49 = vrot.lane.b32.xlu0 %v48, 64
    %v50 = vpop.permute.xlu0 %49
    %vm51 = vcmask 589312
    %52 = vst.msk [vmem:[#allocation0] sm:$0x1] %vm51, %v50
    %s53 = scalar_lea.vmem %s0, 7
    %v54 = vld [vmem:[%s53] sm:$0x1]
    %55 = vrot.lane.b32.xlu0 %v54, 56
    %v56 = vpop.permute.xlu0 %55
    %vm57 = vcmask 523712
    %58 = vst.msk [vmem:[#allocation0] sm:$0x1] %vm57, %v56
    %s59 = scalar_lea.vmem %s0, 6
    %v60 = vld [vmem:[%s59] sm:$0x1]
    %61 = vrot.lane.b32.xlu0 %v60, 48
    %v62 = vpop.permute.xlu0 %61
    %vm63 = vcmask 458112
    %64 = vst.msk [vmem:[#allocation0] sm:$0x1] %vm63, %v62
    %s65 = scalar_lea.vmem %s0, 5
    %v66 = vld [vmem:[%s65] sm:$0x1]
    %67 = vrot.lane.b32.xlu0 %v66, 40
    %v68 = vpop.permute.xlu0 %67
    %vm69 = vcmask 392512
    %70 = vst.msk [vmem:[#allocation0] sm:$0x1] %vm69, %v68
    %s71 = scalar_lea.vmem %s0, 4
    %v72 = vld [vmem:[%s71] sm:$0x1]
    %73 = vrot.lane.b32.xlu0 %v72, 32
    %v74 = vpop.permute.xlu0 %73
    %vm75 = vcmask 326912
    %76 = vst.msk [vmem:[#allocation0] sm:$0x1] %vm75, %v74
    %s77 = scalar_lea.vmem %s0, 3
    %v78 = vld [vmem:[%s77] sm:$0x1]
    %79 = vrot.lane.b32.xlu0 %v78, 24
    %v80 = vpop.permute.xlu0 %79
    %vm81 = vcmask 261312
    %82 = vst.msk [vmem:[#allocation0] sm:$0x1] %vm81, %v80
    %s83 = scalar_lea.vmem %s0, 2
    %v84 = vld [vmem:[%s83] sm:$0x1]
    %85 = vrot.lane.b32.xlu0 %v84, 16
    %v86 = vpop.permute.xlu0 %85
    %vm87 = vcmask 195712
    %88 = vst.msk [vmem:[#allocation0] sm:$0x1] %vm87, %v86
    %s89 = scalar_lea.vmem %s0, 1
    %v90 = vld [vmem:[%s89] sm:$0x1]
    %91 = vrot.lane.b32.xlu0 %v90, 8
    %v92 = vpop.permute.xlu0 %91
    %vm93 = vcmask 130112
    %94 = vst.msk [vmem:[#allocation0] sm:$0x1] %vm93, %v92
    %s96 = sshllo.u32 0, 1
    %v98 = vld [vmem:[#allocation0] sm:%s96]
    %s99 = sshllo.u32 0, 1
    %100 = vst [vmem:[%s1] sm:%s99] %v98

// kernel: upconv_block.3
$region0: #{upconv_block.3}
  #allocation0 [shape = 'u32[]', space=smem, size = 0x4, offset = 0x4, fixed_abs, tag = 'smem constant byte address 0x4 - core index']
  #allocation1 [shape = 'u32[144,128]{1,0:T(1,128)}', space=vmem, size = 0x12000, scoped, tag = 'internal scratch']
  %s0 = inlined_call_operand.vmem [shape: bf16[2,64,128], index: 0, kind: input, shape index: {}]
  %s1 = inlined_call_operand.vmem [shape: f32[1,128], index: 1, kind: input, shape index: {}]
  %s2 = inlined_call_operand.vmem [shape: f32[1,128], index: 2, kind: input, shape index: {}]
  %s3 = inlined_call_operand.vmem [shape: f32[2,64,128], index: 3, kind: output, shape index: {}]
  %s4 = sld [smem:[#allocation0]]
  $region45: #{upconv_block.3} parent=0
    _
  %s6 = ssub.s32 1, %s4
  %s7 = scalar_select 0, %s6, %s4
  loop: start=0, step=1, limit=4
  $region2: #{upconv_block.3} parent=0 // loop_pre_header
    _
  $region3: #{upconv_block.3} parent=0 // loop_header
    %s9 = sphi 0, %s13
    %p10 = scmp.ge.s32.totalorder %s9, 4
    %s16 = sphi 0, %s28
    %s17 = sphi 0, %s24
    %s18 = sphi 0, %s16
    %s19 = sphi 0, %s17
    %s20 = sphi 0, %s18
    %s21 = sphi 0, %s19
    %s33 = sphi 0, %s35
    %s36 = sphi 0, %s33
    %s37 = sphi 0, %s36
    %s53 = sphi 0, %s37
    %s57 = sphi 0, %s57
    %s59 = sphi 0, %s57
    %s60 = sphi 0, %s59
    %s74 = sphi 0, %s60
    %s78 = sphi 0, %s78
    %s80 = sphi 0, %s78
    %s81 = sphi 0, %s80
    %s95 = sphi 0, %s81
    %s103 = sphi 0, %s105
    %s106 = sphi 0, %s103
    %s107 = sphi 0, %s106
    %s123 = sphi 0, %s107
  $region4: #{upconv_block.3} parent=0 // loop_header_branch
    %12 = sbr.rel (%p10) target = $region8
  $region5: #{upconv_block.3} parent=0 // loop_body
    %s14 = ssub.s32 %s9, 1
    %s15 = ssub.s32 %s9, 2
    %s22 = sadd.s32 1, %s17
    %p23 = scmp.ge.s32.totalorder %s22, 1
    %s24 = scalar_select %p23, 0, %s22
    %s25 = sadd.s32 1, %s16
    %s26 = scalar_select %p23, %s25, %s16
    %p27 = scmp.ge.s32.totalorder %s26, 2
    %s28 = scalar_select %p27, 0, %s26
    %s29 = ssub.s32 %s16, %s28
    %s30 = ssub.s32 %s17, %s24
    %s31 = sor.u32 %s29, %s30
    %p32 = scmp.eq.s32.totalorder %s31, 0
    %s34 = sadd.s32 %s33, 1
    %s35 = scalar_select %p32, %s33, %s34
    %p38 = pneg %p32
    %p39 = scmp.eq.s32.totalorder %s9, 1
    %p40 = por %p38, %p39
    %p41 = scmp.ne.s32.totalorder %s33, %s36
    %p42 = scmp.eq.s32.totalorder %s9, 0
    %p43 = por %p41, %p42
    %p44 = scmp.ne.s32.totalorder %s33, %s36
    %p45 = scmp.eq.s32.totalorder %s14, 1
    %p46 = por %p44, %p45
    %p47 = scmp.ne.s32.totalorder %s36, %s37
    %p48 = scmp.eq.s32.totalorder %s14, 0
    %p49 = por %p47, %p48
    %p50 = scmp.ne.s32.totalorder %s36, %s37
    %p51 = scmp.eq.s32.totalorder %s15, 1
    %p52 = por %p50, %p51
    %p54 = scmp.ne.s32.totalorder %s37, %s53
    %p55 = scmp.eq.s32.totalorder %s15, 0
    %p56 = por %p54, %p55
    %s58 = sadd.s32 %s57, 1
    %p61 = scmp.eq.s32.totalorder %s9, 1
    %p62 = scmp.ne.s32.totalorder %s57, %s59
    %p63 = scmp.eq.s32.totalorder %s9, 0
    %p64 = por %p62, %p63
    %p65 = scmp.ne.s32.totalorder %s57, %s59
    %p66 = scmp.eq.s32.totalorder %s14, 1
    %p67 = por %p65, %p66
    %p68 = scmp.ne.s32.totalorder %s59, %s60
    %p69 = scmp.eq.s32.totalorder %s14, 0
    %p70 = por %p68, %p69
    %p71 = scmp.ne.s32.totalorder %s59, %s60
    %p72 = scmp.eq.s32.totalorder %s15, 1
    %p73 = por %p71, %p72
    %p75 = scmp.ne.s32.totalorder %s60, %s74
    %p76 = scmp.eq.s32.totalorder %s15, 0
    %p77 = por %p75, %p76
    %s79 = sadd.s32 %s78, 1
    %p82 = scmp.eq.s32.totalorder %s9, 1
    %p83 = scmp.ne.s32.totalorder %s78, %s80
    %p84 = scmp.eq.s32.totalorder %s9, 0
    %p85 = por %p83, %p84
    %p86 = scmp.ne.s32.totalorder %s78, %s80
    %p87 = scmp.eq.s32.totalorder %s14, 1
    %p88 = por %p86, %p87
    %p89 = scmp.ne.s32.totalorder %s80, %s81
    %p90 = scmp.eq.s32.totalorder %s14, 0
    %p91 = por %p89, %p90
    %p92 = scmp.ne.s32.totalorder %s80, %s81
    %p93 = scmp.eq.s32.totalorder %s15, 1
    %p94 = por %p92, %p93
    %p96 = scmp.ne.s32.totalorder %s81, %s95
    %p97 = scmp.eq.s32.totalorder %s15, 0
    %p98 = por %p96, %p97
    %s99 = ssub.s32 %s16, %s28
    %s100 = ssub.s32 %s17, %s24
    %s101 = sor.u32 %s99, %s100
    %p102 = scmp.eq.s32.totalorder %s101, 0
    %s104 = sadd.s32 %s103, 1
    %s105 = scalar_select %p102, %s103, %s104
    %p108 = pneg %p102
    %p109 = scmp.eq.s32.totalorder %s9, 1
    %p110 = por %p108, %p109
    %p111 = scmp.ne.s32.totalorder %s103, %s106
    %p112 = scmp.eq.s32.totalorder %s9, 0
    %p113 = por %p111, %p112
    %p114 = scmp.ne.s32.totalorder %s103, %s106
    %p115 = scmp.eq.s32.totalorder %s14, 1
    %p116 = por %p114, %p115
    %p117 = scmp.ne.s32.totalorder %s106, %s107
    %p118 = scmp.eq.s32.totalorder %s14, 0
    %p119 = por %p117, %p118
    %p120 = scmp.ne.s32.totalorder %s106, %s107
    %p121 = scmp.eq.s32.totalorder %s15, 1
    %p122 = por %p120, %p121
    %p124 = scmp.ne.s32.totalorder %s107, %s123
    %p125 = scmp.eq.s32.totalorder %s15, 0
    %p126 = por %p124, %p125
    %p127 = scmp.le.s32.totalorder 1, %s9
    %p128 = scmp.lt.s32.totalorder %s9, 3
    %p129 = pnand %p127, %p128
    %p130 = pneg %p129
    // Predicated region
    $region9: #{upconv_block.3} parent=5 // pred_check
      _
    $region10: #{upconv_block.3} parent=5 // pred_check_branch
      %132 = sbr.rel (%p129) target = $region12
    $region11: #{upconv_block.3} parent=5 // pred_region
      %s133 = ssub.s32 %s9, 1
      // Predicated region
      $region13: #{upconv_block.3} parent=11 // pred_check
        %p134 = pneg %p70
      $region14: #{upconv_block.3} parent=11 // pred_check_branch
        %136 = sbr.rel (%p134) target = $region16
      $region15: #{upconv_block.3} parent=11 // pred_region
        _
      $region16: #{upconv_block.3} parent=11 // pred_fallthru
        _
      // Predicated region
      $region17: #{upconv_block.3} parent=11 // pred_check
        %p137 = pneg %p91
      $region18: #{upconv_block.3} parent=11 // pred_check_branch
        %139 = sbr.rel (%p137) target = $region20
      $region19: #{upconv_block.3} parent=11 // pred_region
        _
      $region20: #{upconv_block.3} parent=11 // pred_fallthru
        _
    $region12: #{upconv_block.3} parent=5 // pred_fallthru
      _
    %p140 = scmp.lt.s32.totalorder %s9, 2
    // Predicated region
    $region21: #{upconv_block.3} parent=5 // pred_check
      %p141 = pneg %p140
    $region22: #{upconv_block.3} parent=5 // pred_check_branch
      %143 = sbr.rel (%p141) target = $region24
    $region23: #{upconv_block.3} parent=5 // pred_region
      // Predicated region
      $region25: #{upconv_block.3} parent=23 // pred_check
        %p144 = pneg %p43
      $region26: #{upconv_block.3} parent=23 // pred_check_branch
        %146 = sbr.rel (%p144) target = $region28
      $region27: #{upconv_block.3} parent=23 // pred_region
        %s147 = smul.u32 8, %s17
        %p148 = scmp.lt.s32.totalorder %s16, 1
        %s149 = scalar_select %p148, %s16, 1
        %p150 = scmp.lt.s32.totalorder %s147, 7
        %s151 = scalar_select %p150, %s147, 7
        %s152 = smul.addr %s149, 8
        %s153 = sadd.s32 %s151, %s152
        %s154 = smul.addr %s153, 4
        %s155 = scalar_lea.vmem %s0, %s154
        %s156 = smul.u32 8, %s17
      $region28: #{upconv_block.3} parent=23 // pred_fallthru
        _
    $region24: #{upconv_block.3} parent=5 // pred_fallthru
      _
    %p157 = scmp.le.s32.totalorder 1, %s9
    %p158 = scmp.lt.s32.totalorder %s9, 3
    %p159 = pnand %p157, %p158
    %p160 = pneg %p159
    // Predicated region
    $region29: #{upconv_block.3} parent=5 // pred_check
      _
    $region30: #{upconv_block.3} parent=5 // pred_check_branch
      %162 = sbr.rel (%p159) target = $region32
    $region31: #{upconv_block.3} parent=5 // pred_region
      %s163 = ssub.s32 %s9, 1
      %s164 = smul.u32 8, %s19
      %p165 = scmp.lt.s32.totalorder %s18, 1
      %s166 = scalar_select %p165, %s18, 1
      %p167 = scmp.lt.s32.totalorder %s164, 7
      %s168 = scalar_select %p167, %s164, 7
      %s169 = smul.addr %s166, 8
      %s170 = sadd.s32 %s168, %s169
      %s171 = smul.addr %s170, 4
      %s172 = scalar_lea.vmem %s0, %s171
      %p173 = pneg %p49
      %p174 = pneg %p46
      %p175 = pneg %p70
      %p176 = pneg %p67
      %p177 = pneg %p91
      %p178 = pneg %p88
      %p179 = pneg %p119
      %p180 = pneg %p116
      %s181 = smul.u32 8, %s19
      %p182 = scmp.lt.s32.totalorder %s18, 1
      %s183 = scalar_select %p182, %s18, 1
      %p184 = scmp.lt.s32.totalorder %s181, 7
      %s185 = scalar_select %p184, %s181, 7
      %s186 = smul.addr %s183, 8
      %s187 = sadd.s32 %s185, %s186
      %s188 = smul.addr %s187, 8
      %s189 = scalar_lea.vmem %s3, %s188
      %s190 = smul.u32 8, %s19
      %p191 = scmp.lt.s32.totalorder %s18, 1
      %s192 = scalar_select %p191, %s18, 1
      %p193 = scmp.lt.s32.totalorder %s190, 7
      %s194 = scalar_select %p193, %s190, 7
      %s195 = smul.addr %s192, 8
      %s196 = sadd.s32 %s194, %s195
      %s197 = smul.addr %s196, 4
      %s198 = scalar_lea.vmem %s0, %s197
      %s199 = smul.u32 8, %s19
      %s200 = smul.u32 8, %s19
      %p201 = scmp.lt.s32.totalorder %s18, 1
      %s202 = scalar_select %p201, %s18, 1
      %p203 = scmp.lt.s32.totalorder %s200, 7
      %s204 = scalar_select %p203, %s200, 7
      %s205 = smul.addr %s202, 8
      %s206 = sadd.s32 %s204, %s205
      %s207 = smul.addr %s206, 8
      %s208 = scalar_lea.vmem %s3, %s207
      %s209 = smul.u32 8, %s19
      %v210 = vld [vmem:[%s198] sm:$0xf]
      %v211 = vld [vmem:[%s198 + $0x4] sm:$0xf]
      %v212 = vld [vmem:[%s198 + $0x8] sm:$0xf]
      %v213 = vld [vmem:[%s198 + $0xc] sm:$0xf]
      %v214 = vld [vmem:[%s198 + $0x10] sm:$0xf]
      %v215 = vld [vmem:[%s198 + $0x14] sm:$0xf]
      %v216 = vld [vmem:[%s198 + $0x18] sm:$0xf]
      %v217 = vld [vmem:[%s198 + $0x1c] sm:$0xf]
      %v218 = vunpack.c.l.bf16 %v210
      %v219 = vunpack.c.l.bf16 %v211
      %v220 = vunpack.c.l.bf16 %v212
      %v221 = vunpack.c.l.bf16 %v213
      %v222 = vunpack.c.l.bf16 %v214
      %v223 = vunpack.c.l.bf16 %v215
      %v224 = vunpack.c.l.bf16 %v216
      %v225 = vunpack.c.l.bf16 %v217
      %v226 = vld [vmem:[%s1] sm:$0x1]
      %v228 = vlaneseq
      %v229 = vshrl.u32 %v228, 7
      %v230 = vsub.s32 0, %v229
      %v231 = vrot.slane %v226, %v230
      %v233 = vmul.f32 %v218, %v231
      %v234 = vmul.f32 %v219, %v231
      %v235 = vmul.f32 %v220, %v231
      %v236 = vmul.f32 %v221, %v231
      %v237 = vmul.f32 %v222, %v231
      %v238 = vmul.f32 %v223, %v231
      %v239 = vmul.f32 %v224, %v231
      %v240 = vmul.f32 %v225, %v231
      %v241 = vld [vmem:[%s2] sm:$0x1]
      %v243 = vlaneseq
      %v244 = vshrl.u32 %v243, 7
      %v245 = vsub.s32 0, %v244
      %v246 = vrot.slane %v241, %v245
      %v248 = vadd.f32 %v233, %v246
      %v249 = vadd.f32 %v234, %v246
      %v250 = vadd.f32 %v235, %v246
      %v251 = vadd.f32 %v236, %v246
      %v252 = vadd.f32 %v237, %v246
      %v253 = vadd.f32 %v238, %v246
      %v254 = vadd.f32 %v239, %v246
      %v255 = vadd.f32 %v240, %v246
      %vm256 = vcmp.ge.f32.partialorder %v248, 0.0
      %vm257 = vcmp.ge.f32.partialorder %v249, 0.0
      %vm258 = vcmp.ge.f32.partialorder %v250, 0.0
      %vm259 = vcmp.ge.f32.partialorder %v251, 0.0
      %vm260 = vcmp.ge.f32.partialorder %v252, 0.0
      %vm261 = vcmp.ge.f32.partialorder %v253, 0.0
      %vm262 = vcmp.ge.f32.partialorder %v254, 0.0
      %vm263 = vcmp.ge.f32.partialorder %v255, 0.0
      %v264 = vmul.f32 %v248, 0.01
      %v265 = vmul.f32 %v249, 0.01
      %v266 = vmul.f32 %v250, 0.01
      %v267 = vmul.f32 %v251, 0.01
      %v268 = vmul.f32 %v252, 0.01
      %v269 = vmul.f32 %v253, 0.01
      %v270 = vmul.f32 %v254, 0.01
      %v271 = vmul.f32 %v255, 0.01
      %v272 = vsel %vm256, %v248, %v264
      %v273 = vsel %vm257, %v249, %v265
      %v274 = vsel %vm258, %v250, %v266
      %v275 = vsel %vm259, %v251, %v267
      %v276 = vsel %vm260, %v252, %v268
      %v277 = vsel %vm261, %v253, %v269
      %v278 = vsel %vm262, %v254, %v270
      %v279 = vsel %vm263, %v255, %v271
      %280 = vst [vmem:[%s208] sm:$0xff] %v272
      %281 = vst [vmem:[%s208 + $0x8] sm:$0xff] %v273
      %282 = vst [vmem:[%s208 + $0x10] sm:$0xff] %v274
      %283 = vst [vmem:[%s208 + $0x18] sm:$0xff] %v275
      %284 = vst [vmem:[%s208 + $0x20] sm:$0xff] %v276
      %285 = vst [vmem:[%s208 + $0x28] sm:$0xff] %v277
      %286 = vst [vmem:[%s208 + $0x30] sm:$0xff] %v278
      %287 = vst [vmem:[%s208 + $0x38] sm:$0xff] %v279
      %s288 = smul.u32 8, %s19
      %p289 = scmp.lt.s32.totalorder %s18, 1
      %s290 = scalar_select %p289, %s18, 1
      %p291 = scmp.lt.s32.totalorder %s288, 7
      %s292 = scalar_select %p291, %s288, 7
      %s293 = smul.addr %s290, 8
      %s294 = sadd.s32 %s292, %s293
      %s295 = smul.addr %s294, 8
      %s296 = scalar_lea.vmem %s3, %s295
      // Predicated region
      $region33: #{upconv_block.3} parent=31 // pred_check
        %p297 = pneg %p116
      $region34: #{upconv_block.3} parent=31 // pred_check_branch
        %299 = sbr.rel (%p297) target = $region36
      $region35: #{upconv_block.3} parent=31 // pred_region
        %s300 = smul.u32 8, %s19
      $region36: #{upconv_block.3} parent=31 // pred_fallthru
        _
    $region32: #{upconv_block.3} parent=5 // pred_fallthru
      _
    %p301 = scmp.le.s32.totalorder 2, %s9
    // Predicated region
    $region37: #{upconv_block.3} parent=5 // pred_check
      %p302 = pneg %p301
    $region38: #{upconv_block.3} parent=5 // pred_check_branch
      %304 = sbr.rel (%p302) target = $region40
    $region39: #{upconv_block.3} parent=5 // pred_region
      %s305 = ssub.s32 %s9, 2
      // Predicated region
      $region41: #{upconv_block.3} parent=39 // pred_check
        %p306 = pneg %p122
      $region42: #{upconv_block.3} parent=39 // pred_check_branch
        %308 = sbr.rel (%p306) target = $region44
      $region43: #{upconv_block.3} parent=39 // pred_region
        %s309 = smul.u32 8, %s21
        %p310 = scmp.lt.s32.totalorder %s20, 1
        %s311 = scalar_select %p310, %s20, 1
        %p312 = scmp.lt.s32.totalorder %s309, 7
        %s313 = scalar_select %p312, %s309, 7
        %s314 = smul.addr %s311, 8
        %s315 = sadd.s32 %s313, %s314
        %s316 = smul.addr %s315, 8
        %s317 = scalar_lea.vmem %s3, %s316
      $region44: #{upconv_block.3} parent=39 // pred_fallthru
        _
    $region40: #{upconv_block.3} parent=5 // pred_fallthru
      _
  $region6: #{upconv_block.3} parent=0 // loop_footer
    %s13 = sadd.s32 1, %s9
  $region7: #{upconv_block.3} parent=0 // loop_footer_branch
    %8 = sbr.rel target = $region3
  $region8: #{upconv_block.3} parent=0 // loop_exit
    _

// kernel: upconv_block.2
$region0: #{upconv_block.2}
  #allocation0 [shape = 'u32[]', space=smem, size = 0x4, offset = 0x4, fixed_abs, tag = 'smem constant byte address 0x4 - core index']
  #allocation1 [shape = 'u32[144,128]{1,0:T(1,128)}', space=vmem, size = 0x12000, scoped, tag = 'internal scratch']
  #allocation2 [shape = 'bf16[64,144]{1,0:T(16,128)(2,1)}', space=vmem, size = 0x8000, scoped, tag = 'scratch operand']
  %s0 = inlined_call_operand.vmem [shape: bf16[2,18,18,4], index: 0, kind: input, shape index: {}]
  %s1 = inlined_call_operand.vmem [shape: bf16[144,128], index: 1, kind: input, shape index: {}]
  %s2 = inlined_call_operand.vmem [shape: bf16[2,64,128], index: 2, kind: output, shape index: {0}]
  %s3 = inlined_call_operand.vmem [shape: f32[2,2,128], index: 3, kind: output, shape index: {1}]
  %4 = xla_tuple %s2, %s3
  %s5 = sld [smem:[#allocation0]]
  $region49: #{upconv_block.2} parent=0
    _
  %s7 = ssub.s32 1, %s5
  %s8 = scalar_select 0, %s7, %s5
  loop: start=0, step=1, limit=4
  $region2: #{upconv_block.2} parent=0 // loop_pre_header
    _
  $region3: #{upconv_block.2} parent=0 // loop_header
    %s10 = sphi 0, %s14
    %p11 = scmp.ge.s32.totalorder %s10, 4
    %s20 = sphi 0, %s22
    %s23 = sphi 0, %s20
    %s24 = sphi 0, %s23
    %s40 = sphi 0, %s24
    %s44 = sphi 0, %s44
    %s46 = sphi 0, %s44
    %s47 = sphi 0, %s46
    %s61 = sphi 0, %s47
    %s67 = sphi 0, %s69
    %s70 = sphi 0, %s67
    %s71 = sphi 0, %s70
    %s87 = sphi 0, %s71
    %s93 = sphi 0, %s95
    %s96 = sphi 0, %s93
    %s97 = sphi 0, %s96
    %s113 = sphi 0, %s97
  $region4: #{upconv_block.2} parent=0 // loop_header_branch
    %13 = sbr.rel (%p11) target = $region8
  $region5: #{upconv_block.2} parent=0 // loop_body
    %s15 = ssub.s32 %s10, 1
    %s16 = ssub.s32 %s10, 2
    %s17 = sadd.s32 %s10, 1
    %s18 = ssub.s32 %s10, %s17
    %p19 = scmp.eq.s32.totalorder %s18, 0
    %s21 = sadd.s32 %s20, 1
    %s22 = scalar_select %p19, %s20, %s21
    %p25 = pneg %p19
    %p26 = scmp.eq.s32.totalorder %s10, 1
    %p27 = por %p25, %p26
    %p28 = scmp.ne.s32.totalorder %s20, %s23
    %p29 = scmp.eq.s32.totalorder %s10, 0
    %p30 = por %p28, %p29
    %p31 = scmp.ne.s32.totalorder %s20, %s23
    %p32 = scmp.eq.s32.totalorder %s15, 1
    %p33 = por %p31, %p32
    %p34 = scmp.ne.s32.totalorder %s23, %s24
    %p35 = scmp.eq.s32.totalorder %s15, 0
    %p36 = por %p34, %p35
    %p37 = scmp.ne.s32.totalorder %s23, %s24
    %p38 = scmp.eq.s32.totalorder %s16, 1
    %p39 = por %p37, %p38
    %p41 = scmp.ne.s32.totalorder %s24, %s40
    %p42 = scmp.eq.s32.totalorder %s16, 0
    %p43 = por %p41, %p42
    %s45 = sadd.s32 %s44, 1
    %p48 = scmp.eq.s32.totalorder %s10, 1
    %p49 = scmp.ne.s32.totalorder %s44, %s46
    %p50 = scmp.eq.s32.totalorder %s10, 0
    %p51 = por %p49, %p50
    %p52 = scmp.ne.s32.totalorder %s44, %s46
    %p53 = scmp.eq.s32.totalorder %s15, 1
    %p54 = por %p52, %p53
    %p55 = scmp.ne.s32.totalorder %s46, %s47
    %p56 = scmp.eq.s32.totalorder %s15, 0
    %p57 = por %p55, %p56
    %p58 = scmp.ne.s32.totalorder %s46, %s47
    %p59 = scmp.eq.s32.totalorder %s16, 1
    %p60 = por %p58, %p59
    %p62 = scmp.ne.s32.totalorder %s47, %s61
    %p63 = scmp.eq.s32.totalorder %s16, 0
    %p64 = por %p62, %p63
    %s65 = ssub.s32 %s10, %s17
    %p66 = scmp.eq.s32.totalorder %s65, 0
    %s68 = sadd.s32 %s67, 1
    %s69 = scalar_select %p66, %s67, %s68
    %p72 = pneg %p66
    %p73 = scmp.eq.s32.totalorder %s10, 1
    %p74 = por %p72, %p73
    %p75 = scmp.ne.s32.totalorder %s67, %s70
    %p76 = scmp.eq.s32.totalorder %s10, 0
    %p77 = por %p75, %p76
    %p78 = scmp.ne.s32.totalorder %s67, %s70
    %p79 = scmp.eq.s32.totalorder %s15, 1
    %p80 = por %p78, %p79
    %p81 = scmp.ne.s32.totalorder %s70, %s71
    %p82 = scmp.eq.s32.totalorder %s15, 0
    %p83 = por %p81, %p82
    %p84 = scmp.ne.s32.totalorder %s70, %s71
    %p85 = scmp.eq.s32.totalorder %s16, 1
    %p86 = por %p84, %p85
    %p88 = scmp.ne.s32.totalorder %s71, %s87
    %p89 = scmp.eq.s32.totalorder %s16, 0
    %p90 = por %p88, %p89
    %s91 = ssub.s32 %s10, %s17
    %p92 = scmp.eq.s32.totalorder %s91, 0
    %s94 = sadd.s32 %s93, 1
    %s95 = scalar_select %p92, %s93, %s94
    %p98 = pneg %p92
    %p99 = scmp.eq.s32.totalorder %s10, 1
    %p100 = por %p98, %p99
    %p101 = scmp.ne.s32.totalorder %s93, %s96
    %p102 = scmp.eq.s32.totalorder %s10, 0
    %p103 = por %p101, %p102
    %p104 = scmp.ne.s32.totalorder %s93, %s96
    %p105 = scmp.eq.s32.totalorder %s15, 1
    %p106 = por %p104, %p105
    %p107 = scmp.ne.s32.totalorder %s96, %s97
    %p108 = scmp.eq.s32.totalorder %s15, 0
    %p109 = por %p107, %p108
    %p110 = scmp.ne.s32.totalorder %s96, %s97
    %p111 = scmp.eq.s32.totalorder %s16, 1
    %p112 = por %p110, %p111
    %p114 = scmp.ne.s32.totalorder %s97, %s113
    %p115 = scmp.eq.s32.totalorder %s16, 0
    %p116 = por %p114, %p115
    %p117 = scmp.le.s32.totalorder 1, %s10
    %p118 = scmp.lt.s32.totalorder %s10, 3
    %p119 = pnand %p117, %p118
    %p120 = pneg %p119
    // Predicated region
    $region9: #{upconv_block.2} parent=5 // pred_check
      _
    $region10: #{upconv_block.2} parent=5 // pred_check_branch
      %122 = sbr.rel (%p119) target = $region12
    $region11: #{upconv_block.2} parent=5 // pred_region
      %s123 = ssub.s32 %s10, 1
      // Predicated region
      $region13: #{upconv_block.2} parent=11 // pred_check
        %p124 = pneg %p57
      $region14: #{upconv_block.2} parent=11 // pred_check_branch
        %126 = sbr.rel (%p124) target = $region16
      $region15: #{upconv_block.2} parent=11 // pred_region
        _
      $region16: #{upconv_block.2} parent=11 // pred_fallthru
        _
    $region12: #{upconv_block.2} parent=5 // pred_fallthru
      _
    %p127 = scmp.lt.s32.totalorder %s10, 2
    // Predicated region
    $region17: #{upconv_block.2} parent=5 // pred_check
      %p128 = pneg %p127
    $region18: #{upconv_block.2} parent=5 // pred_check_branch
      %130 = sbr.rel (%p128) target = $region20
    $region19: #{upconv_block.2} parent=5 // pred_region
      // Predicated region
      $region21: #{upconv_block.2} parent=19 // pred_check
        %p131 = pneg %p30
      $region22: #{upconv_block.2} parent=19 // pred_check_branch
        %133 = sbr.rel (%p131) target = $region24
      $region23: #{upconv_block.2} parent=19 // pred_region
        %p134 = scmp.lt.s32.totalorder %s10, 1
        %s135 = scalar_select %p134, %s10, 1
        %s136 = smul.addr %s135, 54
        %s137 = smul.addr %s136, 4
        %s138 = scalar_lea.vmem %s0, %s137
      $region24: #{upconv_block.2} parent=19 // pred_fallthru
        _
    $region20: #{upconv_block.2} parent=5 // pred_fallthru
      _
    %p139 = scmp.le.s32.totalorder 1, %s10
    %p140 = scmp.lt.s32.totalorder %s10, 3
    %p141 = pnand %p139, %p140
    %p142 = pneg %p141
    // Predicated region
    $region25: #{upconv_block.2} parent=5 // pred_check
      _
    $region26: #{upconv_block.2} parent=5 // pred_check_branch
      %144 = sbr.rel (%p141) target = $region28
    $region27: #{upconv_block.2} parent=5 // pred_region
      %s145 = ssub.s32 %s10, 1
      %p146 = scmp.lt.s32.totalorder %s15, 1
      %s147 = scalar_select %p146, %s15, 1
      %s148 = smul.addr %s147, 54
      %s149 = smul.addr %s148, 4
      %s150 = scalar_lea.vmem %s0, %s149
      %p151 = pneg %p36
      %p152 = pneg %p33
      %p153 = pneg %p57
      %p154 = pneg %p54
      %p155 = pneg %p83
      %p156 = pneg %p80
      %p157 = scmp.lt.s32.totalorder %s15, 1
      %s158 = scalar_select %p157, %s15, 1
      %s159 = smul.addr %s158, 8
      %s160 = smul.addr %s159, 4
      %s161 = scalar_lea.vmem %s2, %s160
      %p162 = pneg %p109
      %p163 = pneg %p106
      %p164 = scmp.lt.s32.totalorder %s15, 1
      %s165 = scalar_select %p164, %s15, 1
      %s166 = smul.addr %s165, 2
      %s167 = scalar_lea.vmem %s3, %s166
      %p168 = scmp.lt.s32.totalorder %s15, 1
      %s169 = scalar_select %p168, %s15, 1
      %s170 = smul.addr %s169, 54
      %s171 = smul.addr %s170, 4
      %s172 = scalar_lea.vmem %s0, %s171
      %p173 = scmp.lt.s32.totalorder %s15, 1
      %s174 = scalar_select %p173, %s15, 1
      %s175 = smul.addr %s174, 8
      %s176 = smul.addr %s175, 4
      %s177 = scalar_lea.vmem %s2, %s176
      %p178 = scmp.lt.s32.totalorder %s15, 1
      %s179 = scalar_select %p178, %s15, 1
      %s180 = smul.addr %s179, 2
      %s181 = scalar_lea.vmem %s3, %s180
      %v183 = vld [vmem:[%s172] sm:$0xf]
      %v184 = vld [vmem:[%s172 + $0x4] sm:$0xf]
      %v185 = vld [vmem:[%s172 + $0x8] sm:$0x1]
      %v186 = vld [vmem:[%s172 + $0xc] sm:$0xf]
      %v187 = vld [vmem:[%s172 + $0x10] sm:$0xf]
      %v188 = vld [vmem:[%s172 + $0x14] sm:$0x1]
      %v189 = vld [vmem:[%s172 + $0x18] sm:$0xf]
      %v190 = vld [vmem:[%s172 + $0x1c] sm:$0xf]
      %v191 = vld [vmem:[%s172 + $0x20] sm:$0x1]
      %v192 = vld [vmem:[%s172 + $0x24] sm:$0xf]
      %v193 = vld [vmem:[%s172 + $0x28] sm:$0xf]
      %v194 = vld [vmem:[%s172 + $0x2c] sm:$0x1]
      %v195 = vld [vmem:[%s172 + $0x30] sm:$0xf]
      %v196 = vld [vmem:[%s172 + $0x34] sm:$0xf]
      %v197 = vld [vmem:[%s172 + $0x38] sm:$0x1]
      %v198 = vld [vmem:[%s172 + $0x3c] sm:$0xf]
      %v199 = vld [vmem:[%s172 + $0x40] sm:$0xf]
      %v200 = vld [vmem:[%s172 + $0x44] sm:$0x1]
      %v201 = vld [vmem:[%s172 + $0x48] sm:$0xf]
      %v202 = vld [vmem:[%s172 + $0x4c] sm:$0xf]
      %v203 = vld [vmem:[%s172 + $0x50] sm:$0x1]
      %v204 = vld [vmem:[%s172 + $0x54] sm:$0xf]
      %v205 = vld [vmem:[%s172 + $0x58] sm:$0xf]
      %v206 = vld [vmem:[%s172 + $0x5c] sm:$0x1]
      %v207 = vld [vmem:[%s172 + $0x60] sm:$0xf]
      %v208 = vld [vmem:[%s172 + $0x64] sm:$0xf]
      %v209 = vld [vmem:[%s172 + $0x68] sm:$0x1]
      %v210 = vld [vmem:[%s172 + $0x6c] sm:$0xf]
      %v211 = vld [vmem:[%s172 + $0x70] sm:$0xf]
      %v212 = vld [vmem:[%s172 + $0x74] sm:$0x1]
      %v213 = vld [vmem:[%s172 + $0x78] sm:$0xf]
      %v214 = vld [vmem:[%s172 + $0x7c] sm:$0xf]
      %v215 = vld [vmem:[%s172 + $0x80] sm:$0x1]
      %v216 = vld [vmem:[%s172 + $0x84] sm:$0xf]
      %v217 = vld [vmem:[%s172 + $0x88] sm:$0xf]
      %v218 = vld [vmem:[%s172 + $0x8c] sm:$0x1]
      %v219 = vld [vmem:[%s172 + $0x90] sm:$0xf]
      %v220 = vld [vmem:[%s172 + $0x94] sm:$0xf]
      %v221 = vld [vmem:[%s172 + $0x98] sm:$0x1]
      %v222 = vld [vmem:[%s172 + $0x9c] sm:$0xf]
      %v223 = vld [vmem:[%s172 + $0xa0] sm:$0xf]
      %v224 = vld [vmem:[%s172 + $0xa4] sm:$0x1]
      %v225 = vld [vmem:[%s172 + $0xa8] sm:$0xf]
      %v226 = vld [vmem:[%s172 + $0xac] sm:$0xf]
      %v227 = vld [vmem:[%s172 + $0xb0] sm:$0x1]
      %v228 = vld [vmem:[%s172 + $0xb4] sm:$0xf]
      %v229 = vld [vmem:[%s172 + $0xb8] sm:$0xf]
      %v230 = vld [vmem:[%s172 + $0xbc] sm:$0x1]
      %v231 = vld [vmem:[%s172 + $0xc0] sm:$0xf]
      %v232 = vld [vmem:[%s172 + $0xc4] sm:$0xf]
      %v233 = vld [vmem:[%s172 + $0xc8] sm:$0x1]
      %v234 = vld [vmem:[%s172 + $0xcc] sm:$0xf]
      %v235 = vld [vmem:[%s172 + $0xd0] sm:$0xf]
      %v236 = vld [vmem:[%s172 + $0xd4] sm:$0x1]
      %v245 = vunpack.c.l.b16 %v183
      %v246 = vunpack.c.l.b16 %v184
      %v247 = vunpack.c.l.b16 %v186
      %v248 = vunpack.c.l.b16 %v187
      %v249 = vunpack.c.l.b16 %v189
      %v250 = vunpack.c.l.b16 %v190
      %v251 = vunpack.c.l.b16 %v192
      %v252 = vunpack.c.l.b16 %v193
      %v253 = vpack.c.b16 %v246, %v245
      %v254 = vpack.c.b16 %v248, %v247
      %v255 = vpack.c.b16 %v250, %v249
      %v256 = vpack.c.b16 %v252, %v251
      %vm261 = vcmask 31744
      %262 = vst.msk [vmem:[#allocation2] sm:$0xff] %vm261, %v253
      %263 = vst.msk [vmem:[#allocation2 + $0x10] sm:$0xff] %vm261, %v254
      %264 = vst.msk [vmem:[#allocation2 + $0x20] sm:$0xff] %vm261, %v255
      %265 = vst.msk [vmem:[#allocation2 + $0x30] sm:$0xff] %vm261, %v256
      %vm266 = vsmask.f32 3328
      %vm267 = vsmask.f32 7440
      %vm268 = vmor %vm266, %vm267
      %v270 = vshrl.u32 %v183, 16
      %v272 = vrot.slane %v270, 4
      %v273 = vshll.u32 %v183, 16
      %v275 = vrot.slane %v273, 5
      %v276 = vor.u32 %v272, %v275
      %v277 = vrot.slane %v276, 4
      %v279 = vshll.u32 %v184, 16
      %v281 = vrot.slane %v279, 5
      %v282 = vsel %vm268, %v277, %v281
      %v283 = vshrl.u32 %v184, 16
      %v285 = vrot.slane %v283, 4
      %v286 = vor.u32 %v285, %v281
      %v287 = vrot.slane %v286, 4
      %v289 = vshll.u32 %v185, 16
      %v291 = vrot.slane %v289, 5
      %v292 = vsel %vm268, %v287, %v291
      %v294 = vshrl.u32 %v186, 16
      %v296 = vrot.slane %v294, 4
      %v297 = vshll.u32 %v186, 16
      %v299 = vrot.slane %v297, 5
      %v300 = vor.u32 %v296, %v299
      %v301 = vrot.slane %v300, 4
      %v303 = vshll.u32 %v187, 16
      %v305 = vrot.slane %v303, 5
      %v306 = vsel %vm268, %v301, %v305
      %v307 = vshrl.u32 %v187, 16
      %v309 = vrot.slane %v307, 4
      %v310 = vor.u32 %v309, %v305
      %v311 = vrot.slane %v310, 4
      %v313 = vshll.u32 %v188, 16
      %v315 = vrot.slane %v313, 5
      %v316 = vsel %vm268, %v311, %v315
      %v318 = vshrl.u32 %v189, 16
      %v320 = vrot.slane %v318, 4
      %v321 = vshll.u32 %v189, 16
      %v323 = vrot.slane %v321, 5
      %v324 = vor.u32 %v320, %v323
      %v325 = vrot.slane %v324, 4
      %v327 = vshll.u32 %v190, 16
      %v329 = vrot.slane %v327, 5
      %v330 = vsel %vm268, %v325, %v329
      %v331 = vshrl.u32 %v190, 16
      %v333 = vrot.slane %v331, 4
      %v334 = vor.u32 %v333, %v329
      %v335 = vrot.slane %v334, 4
      %v337 = vshll.u32 %v191, 16
      %v339 = vrot.slane %v337, 5
      %v340 = vsel %vm268, %v335, %v339
      %v342 = vshrl.u32 %v192, 16
      %v344 = vrot.slane %v342, 4
      %v345 = vshll.u32 %v192, 16
      %v347 = vrot.slane %v345, 5
      %v348 = vor.u32 %v344, %v347
      %v349 = vrot.slane %v348, 4
      %v351 = vshll.u32 %v193, 16
      %v353 = vrot.slane %v351, 5
      %v354 = vsel %vm268, %v349, %v353
      %v355 = vshrl.u32 %v193, 16
      %v357 = vrot.slane %v355, 4
      %v358 = vor.u32 %v357, %v353
      %v359 = vrot.slane %v358, 4
      %v361 = vshll.u32 %v194, 16
      %v363 = vrot.slane %v361, 5
      %v364 = vsel %vm268, %v359, %v363
      %v365 = vunpack.c.l.b16 %v282
      %v366 = vunpack.c.l.b16 %v292
      %v367 = vunpack.c.l.b16 %v306
      %v368 = vunpack.c.l.b16 %v316
      %v369 = vunpack.c.l.b16 %v330
      %v370 = vunpack.c.l.b16 %v340
      %v371 = vunpack.c.l.b16 %v354
      %v372 = vunpack.c.l.b16 %v364
      %v373 = vpack.c.b16 %v366, %v365
      %v374 = vpack.c.b16 %v368, %v367
      %v375 = vpack.c.b16 %v370, %v369
      %v376 = vpack.c.b16 %v372, %v371
      %377 = vrot.lane.b32.xlu0 %v373, 4
      %v378 = vpop.permute.xlu0 %377
      %379 = vrot.lane.b32.xlu0 %v374, 4
      %v380 = vpop.permute.xlu0 %379
      %381 = vrot.lane.b32.xlu0 %v375, 4
      %v382 = vpop.permute.xlu0 %381
      %383 = vrot.lane.b32.xlu0 %v376, 4
      %v384 = vpop.permute.xlu0 %383
      %vm389 = vcmask 64544
      %390 = vst.msk [vmem:[#allocation2] sm:$0xff] %vm389, %v378
      %391 = vst.msk [vmem:[#allocation2 + $0x10] sm:$0xff] %vm389, %v380
      %392 = vst.msk [vmem:[#allocation2 + $0x20] sm:$0xff] %vm389, %v382
      %393 = vst.msk [vmem:[#allocation2 + $0x30] sm:$0xff] %vm389, %v384
      %vm398 = vcmask 1042432
      %vm399 = vcmask 1046532
      %vm400 = vmor %vm398, %vm399
      %v401 = vrot.slane %v183, 5
      %v402 = vrot.slane %v401, 4
      %v403 = vrot.slane %v184, 5
      %v404 = vsel %vm400, %v402, %v403
      %v405 = vrot.slane %v403, 4
      %v406 = vrot.slane %v185, 5
      %v407 = vsel %vm400, %v405, %v406
      %v408 = vrot.slane %v186, 5
      %v409 = vrot.slane %v408, 4
      %v410 = vrot.slane %v187, 5
      %v411 = vsel %vm400, %v409, %v410
      %v412 = vrot.slane %v410, 4
      %v413 = vrot.slane %v188, 5
      %v414 = vsel %vm400, %v412, %v413
      %v415 = vrot.slane %v189, 5
      %v416 = vrot.slane %v415, 4
      %v417 = vrot.slane %v190, 5
      %v418 = vsel %vm400, %v416, %v417
      %v419 = vrot.slane %v417, 4
      %v420 = vrot.slane %v191, 5
      %v421 = vsel %vm400, %v419, %v420
      %v422 = vrot.slane %v192, 5
      %v423 = vrot.slane %v422, 4
      %v424 = vrot.slane %v193, 5
      %v425 = vsel %vm400, %v423, %v424
      %v426 = vrot.slane %v424, 4
      %v427 = vrot.slane %v194, 5
      %v428 = vsel %vm400, %v426, %v427
      %v429 = vunpack.c.l.b16 %v404
      %v430 = vunpack.c.l.b16 %v407
      %v431 = vunpack.c.l.b16 %v411
      %v432 = vunpack.c.l.b16 %v414
      %v433 = vunpack.c.l.b16 %v418
      %v434 = vunpack.c.l.b16 %v421
      %v435 = vunpack.c.l.b16 %v425
      %v436 = vunpack.c.l.b16 %v428
      %v437 = vpack.c.b16 %v430, %v429
      %v438 = vpack.c.b16 %v432, %v431
      %v439 = vpack.c.b16 %v434, %v433
      %v440 = vpack.c.b16 %v436, %v435
      %441 = vrot.lane.b32.xlu0 %v437, 8
      %v442 = vpop.permute.xlu0 %441
      %443 = vrot.lane.b32.xlu0 %v438, 8
      %v444 = vpop.permute.xlu0 %443
      %445 = vrot.lane.b32.xlu0 %v439, 8
      %v446 = vpop.permute.xlu0 %445
      %447 = vrot.lane.b32.xlu0 %v440, 8
      %v448 = vpop.permute.xlu0 %447
      %vm453 = vcmask 97344
      %454 = vst.msk [vmem:[#allocation2] sm:$0xff] %vm453, %v442
      %455 = vst.msk [vmem:[#allocation2 + $0x10] sm:$0xff] %vm453, %v444
      %456 = vst.msk [vmem:[#allocation2 + $0x20] sm:$0xff] %vm453, %v446
      %457 = vst.msk [vmem:[#allocation2 + $0x30] sm:$0xff] %vm453, %v448
      %v460 = vunpack.c.l.b16 %v195
      %v461 = vunpack.c.l.b16 %v196
      %v462 = vpack.c.b16 %v461, %v460
      %463 = vrot.lane.b32.xlu0 %v254, 12
      %v464 = vpop.permute.xlu0 %463
      %465 = vrot.lane.b32.xlu0 %v255, 12
      %v466 = vpop.permute.xlu0 %465
      %467 = vrot.lane.b32.xlu0 %v256, 12
      %v468 = vpop.permute.xlu0 %467
      %469 = vrot.lane.b32.xlu0 %v462, 12
      %v470 = vpop.permute.xlu0 %469
      %vm475 = vcmask 130144
      %476 = vst.msk [vmem:[#allocation2] sm:$0xff] %vm475, %v464
      %477 = vst.msk [vmem:[#allocation2 + $0x10] sm:$0xff] %vm475, %v466
      %478 = vst.msk [vmem:[#allocation2 + $0x20] sm:$0xff] %vm475, %v468
      %479 = vst.msk [vmem:[#allocation2 + $0x30] sm:$0xff] %vm475, %v470
      %v481 = vshrl.u32 %v195, 16
      %v483 = vrot.slane %v481, 4
      %v484 = vshll.u32 %v195, 16
      %v486 = vrot.slane %v484, 5
      %v487 = vor.u32 %v483, %v486
      %v488 = vrot.slane %v487, 4
      %v490 = vshll.u32 %v196, 16
      %v492 = vrot.slane %v490, 5
      %v493 = vsel %vm268, %v488, %v492
      %v494 = vshrl.u32 %v196, 16
      %v496 = vrot.slane %v494, 4
      %v497 = vor.u32 %v496, %v492
      %v498 = vrot.slane %v497, 4
      %v500 = vshll.u32 %v197, 16
      %v502 = vrot.slane %v500, 5
      %v503 = vsel %vm268, %v498, %v502
      %v504 = vunpack.c.l.b16 %v493
      %v505 = vunpack.c.l.b16 %v503
      %v506 = vpack.c.b16 %v505, %v504
      %507 = vrot.lane.b32.xlu0 %v374, 16
      %v508 = vpop.permute.xlu0 %507
      %509 = vrot.lane.b32.xlu0 %v375, 16
      %v510 = vpop.permute.xlu0 %509
      %511 = vrot.lane.b32.xlu0 %v376, 16
      %v512 = vpop.permute.xlu0 %511
      %513 = vrot.lane.b32.xlu0 %v506, 16
      %v514 = vpop.permute.xlu0 %513
      %vm519 = vcmask 162944
      %520 = vst.msk [vmem:[#allocation2] sm:$0xff] %vm519, %v508
      %521 = vst.msk [vmem:[#allocation2 + $0x10] sm:$0xff] %vm519, %v510
      %522 = vst.msk [vmem:[#allocation2 + $0x20] sm:$0xff] %vm519, %v512
      %523 = vst.msk [vmem:[#allocation2 + $0x30] sm:$0xff] %vm519, %v514
      %v525 = vrot.slane %v195, 5
      %v526 = vrot.slane %v525, 4
      %v527 = vrot.slane %v196, 5
      %v528 = vsel %vm400, %v526, %v527
      %v529 = vrot.slane %v527, 4
      %v530 = vrot.slane %v197, 5
      %v531 = vsel %vm400, %v529, %v530
      %v532 = vunpack.c.l.b16 %v528
      %v533 = vunpack.c.l.b16 %v531
      %v534 = vpack.c.b16 %v533, %v532
      %535 = vrot.lane.b32.xlu0 %v438, 20
      %v536 = vpop.permute.xlu0 %535
      %537 = vrot.lane.b32.xlu0 %v439, 20
      %v538 = vpop.permute.xlu0 %537
      %539 = vrot.lane.b32.xlu0 %v440, 20
      %v540 = vpop.permute.xlu0 %539
      %541 = vrot.lane.b32.xlu0 %v534, 20
      %v542 = vpop.permute.xlu0 %541
      %vm547 = vcmask 195744
      %548 = vst.msk [vmem:[#allocation2] sm:$0xff] %vm547, %v536
      %549 = vst.msk [vmem:[#allocation2 + $0x10] sm:$0xff] %vm547, %v538
      %550 = vst.msk [vmem:[#allocation2 + $0x20] sm:$0xff] %vm547, %v540
      %551 = vst.msk [vmem:[#allocation2 + $0x30] sm:$0xff] %vm547, %v542
      %v554 = vunpack.c.l.b16 %v198
      %v555 = vunpack.c.l.b16 %v199
      %v556 = vpack.c.b16 %v555, %v554
      %557 = vrot.lane.b32.xlu0 %v255, 24
      %v558 = vpop.permute.xlu0 %557
      %559 = vrot.lane.b32.xlu0 %v256, 24
      %v560 = vpop.permute.xlu0 %559
      %561 = vrot.lane.b32.xlu0 %v462, 24
      %v562 = vpop.permute.xlu0 %561
      %563 = vrot.lane.b32.xlu0 %v556, 24
      %v564 = vpop.permute.xlu0 %563
      %vm569 = vcmask 228544
      %570 = vst.msk [vmem:[#allocation2] sm:$0xff] %vm569, %v558
      %571 = vst.msk [vmem:[#allocation2 + $0x10] sm:$0xff] %vm569, %v560
      %572 = vst.msk [vmem:[#allocation2 + $0x20] sm:$0xff] %vm569, %v562
      %573 = vst.msk [vmem:[#allocation2 + $0x30] sm:$0xff] %vm569, %v564
      %v575 = vshrl.u32 %v198, 16
      %v577 = vrot.slane %v575, 4
      %v578 = vshll.u32 %v198, 16
      %v580 = vrot.slane %v578, 5
      %v581 = vor.u32 %v577, %v580
      %v582 = vrot.slane %v581, 4
      %v584 = vshll.u32 %v199, 16
      %v586 = vrot.slane %v584, 5
      %v587 = vsel %vm268, %v582, %v586
      %v588 = vshrl.u32 %v199, 16
      %v590 = vrot.slane %v588, 4
      %v591 = vor.u32 %v590, %v586
      %v592 = vrot.slane %v591, 4
      %v594 = vshll.u32 %v200, 16
      %v596 = vrot.slane %v594, 5
      %v597 = vsel %vm268, %v592, %v596
      %v598 = vunpack.c.l.b16 %v587
      %v599 = vunpack.c.l.b16 %v597
      %v600 = vpack.c.b16 %v599, %v598
      %601 = vrot.lane.b32.xlu0 %v375, 28
      %v602 = vpop.permute.xlu0 %601
      %603 = vrot.lane.b32.xlu0 %v376, 28
      %v604 = vpop.permute.xlu0 %603
      %605 = vrot.lane.b32.xlu0 %v506, 28
      %v606 = vpop.permute.xlu0 %605
      %607 = vrot.lane.b32.xlu0 %v600, 28
      %v608 = vpop.permute.xlu0 %607
      %vm613 = vcmask 261344
      %614 = vst.msk [vmem:[#allocation2] sm:$0xff] %vm613, %v602
      %615 = vst.msk [vmem:[#allocation2 + $0x10] sm:$0xff] %vm613, %v604
      %616 = vst.msk [vmem:[#allocation2 + $0x20] sm:$0xff] %vm613, %v606
      %617 = vst.msk [vmem:[#allocation2 + $0x30] sm:$0xff] %vm613, %v608
      %v619 = vrot.slane %v198, 5
      %v620 = vrot.slane %v619, 4
      %v621 = vrot.slane %v199, 5
      %v622 = vsel %vm400, %v620, %v621
      %v623 = vrot.slane %v621, 4
      %v624 = vrot.slane %v200, 5
      %v625 = vsel %vm400, %v623, %v624
      %v626 = vunpack.c.l.b16 %v622
      %v627 = vunpack.c.l.b16 %v625
      %v628 = vpack.c.b16 %v627, %v626
      %629 = vrot.lane.b32.xlu0 %v439, 32
      %v630 = vpop.permute.xlu0 %629
      %631 = vrot.lane.b32.xlu0 %v440, 32
      %v632 = vpop.permute.xlu0 %631
      %633 = vrot.lane.b32.xlu0 %v534, 32
      %v634 = vpop.permute.xlu0 %633
      %635 = vrot.lane.b32.xlu0 %v628, 32
      %v636 = vpop.permute.xlu0 %635
      %vm641 = vcmask 294144
      %642 = vst.msk [vmem:[#allocation2] sm:$0xff] %vm641, %v630
      %643 = vst.msk [vmem:[#allocation2 + $0x10] sm:$0xff] %vm641, %v632
      %644 = vst.msk [vmem:[#allocation2 + $0x20] sm:$0xff] %vm641, %v634
      %645 = vst.msk [vmem:[#allocation2 + $0x30] sm:$0xff] %vm641, %v636
      %v650 = vunpack.c.l.b16 %v201
      %v651 = vunpack.c.l.b16 %v202
      %v652 = vunpack.c.l.b16 %v204
      %v653 = vunpack.c.l.b16 %v205
      %v654 = vpack.c.b16 %v651, %v650
      %v655 = vpack.c.b16 %v653, %v652
      %656 = vrot.lane.b32.xlu0 %v462, 36
      %v657 = vpop.permute.xlu0 %656
      %658 = vrot.lane.b32.xlu0 %v556, 36
      %v659 = vpop.permute.xlu0 %658
      %660 = vrot.lane.b32.xlu0 %v654, 36
      %v661 = vpop.permute.xlu0 %660
      %662 = vrot.lane.b32.xlu0 %v655, 36
      %v663 = vpop.permute.xlu0 %662
      %vm668 = vcmask 326944
      %669 = vst.msk [vmem:[#allocation2] sm:$0xff] %vm668, %v657
      %670 = vst.msk [vmem:[#allocation2 + $0x10] sm:$0xff] %vm668, %v659
      %671 = vst.msk [vmem:[#allocation2 + $0x20] sm:$0xff] %vm668, %v661
      %672 = vst.msk [vmem:[#allocation2 + $0x30] sm:$0xff] %vm668, %v663
      %v674 = vshrl.u32 %v201, 16
      %v676 = vrot.slane %v674, 4
      %v677 = vshll.u32 %v201, 16
      %v679 = vrot.slane %v677, 5
      %v680 = vor.u32 %v676, %v679
      %v681 = vrot.slane %v680, 4
      %v683 = vshll.u32 %v202, 16
      %v685 = vrot.slane %v683, 5
      %v686 = vsel %vm268, %v681, %v685
      %v687 = vshrl.u32 %v202, 16
      %v689 = vrot.slane %v687, 4
      %v690 = vor.u32 %v689, %v685
      %v691 = vrot.slane %v690, 4
      %v693 = vshll.u32 %v203, 16
      %v695 = vrot.slane %v693, 5
      %v696 = vsel %vm268, %v691, %v695
      %v698 = vshrl.u32 %v204, 16
      %v700 = vrot.slane %v698, 4
      %v701 = vshll.u32 %v204, 16
      %v703 = vrot.slane %v701, 5
      %v704 = vor.u32 %v700, %v703
      %v705 = vrot.slane %v704, 4
      %v707 = vshll.u32 %v205, 16
      %v709 = vrot.slane %v707, 5
      %v710 = vsel %vm268, %v705, %v709
      %v711 = vshrl.u32 %v205, 16
      %v713 = vrot.slane %v711, 4
      %v714 = vor.u32 %v713, %v709
      %v715 = vrot.slane %v714, 4
      %v717 = vshll.u32 %v206, 16
      %v719 = vrot.slane %v717, 5
      %v720 = vsel %vm268, %v715, %v719
      %v721 = vunpack.c.l.b16 %v686
      %v722 = vunpack.c.l.b16 %v696
      %v723 = vunpack.c.l.b16 %v710
      %v724 = vunpack.c.l.b16 %v720
      %v725 = vpack.c.b16 %v722, %v721
      %v726 = vpack.c.b16 %v724, %v723
      %727 = vrot.lane.b32.xlu0 %v506, 40
      %v728 = vpop.permute.xlu0 %727
      %729 = vrot.lane.b32.xlu0 %v600, 40
      %v730 = vpop.permute.xlu0 %729
      %731 = vrot.lane.b32.xlu0 %v725, 40
      %v732 = vpop.permute.xlu0 %731
      %733 = vrot.lane.b32.xlu0 %v726, 40
      %v734 = vpop.permute.xlu0 %733
      %vm739 = vcmask 359744
      %740 = vst.msk [vmem:[#allocation2] sm:$0xff] %vm739, %v728
      %741 = vst.msk [vmem:[#allocation2 + $0x10] sm:$0xff] %vm739, %v730
      %742 = vst.msk [vmem:[#allocation2 + $0x20] sm:$0xff] %vm739, %v732
      %743 = vst.msk [vmem:[#allocation2 + $0x30] sm:$0xff] %vm739, %v734
      %v746 = vrot.slane %v201, 5
      %v747 = vrot.slane %v746, 4
      %v748 = vrot.slane %v202, 5
      %v749 = vsel %vm400, %v747, %v748
      %v750 = vrot.slane %v748, 4
      %v751 = vrot.slane %v203, 5
      %v752 = vsel %vm400, %v750, %v751
      %v753 = vrot.slane %v204, 5
      %v754 = vrot.slane %v753, 4
      %v755 = vrot.slane %v205, 5
      %v756 = vsel %vm400, %v754, %v755
      %v757 = vrot.slane %v755, 4
      %v758 = vrot.slane %v206, 5
      %v759 = vsel %vm400, %v757, %v758
      %v760 = vunpack.c.l.b16 %v749
      %v761 = vunpack.c.l.b16 %v752
      %v762 = vunpack.c.l.b16 %v756
      %v763 = vunpack.c.l.b16 %v759
      %v764 = vpack.c.b16 %v761, %v760
      %v765 = vpack.c.b16 %v763, %v762
      %766 = vrot.lane.b32.xlu0 %v534, 44
      %v767 = vpop.permute.xlu0 %766
      %768 = vrot.lane.b32.xlu0 %v628, 44
      %v769 = vpop.permute.xlu0 %768
      %770 = vrot.lane.b32.xlu0 %v764, 44
      %v771 = vpop.permute.xlu0 %770
      %772 = vrot.lane.b32.xlu0 %v765, 44
      %v773 = vpop.permute.xlu0 %772
      %vm778 = vcmask 392544
      %779 = vst.msk [vmem:[#allocation2] sm:$0xff] %vm778, %v767
      %780 = vst.msk [vmem:[#allocation2 + $0x10] sm:$0xff] %vm778, %v769
      %781 = vst.msk [vmem:[#allocation2 + $0x20] sm:$0xff] %vm778, %v771
      %782 = vst.msk [vmem:[#allocation2 + $0x30] sm:$0xff] %vm778, %v773
      %v785 = vunpack.c.l.b16 %v207
      %v786 = vunpack.c.l.b16 %v208
      %v787 = vpack.c.b16 %v786, %v785
      %788 = vrot.lane.b32.xlu0 %v556, 48
      %v789 = vpop.permute.xlu0 %788
      %790 = vrot.lane.b32.xlu0 %v654, 48
      %v791 = vpop.permute.xlu0 %790
      %792 = vrot.lane.b32.xlu0 %v655, 48
      %v793 = vpop.permute.xlu0 %792
      %794 = vrot.lane.b32.xlu0 %v787, 48
      %v795 = vpop.permute.xlu0 %794
      %vm800 = vcmask 425344
      %801 = vst.msk [vmem:[#allocation2] sm:$0xff] %vm800, %v789
      %802 = vst.msk [vmem:[#allocation2 + $0x10] sm:$0xff] %vm800, %v791
      %803 = vst.msk [vmem:[#allocation2 + $0x20] sm:$0xff] %vm800, %v793
      %804 = vst.msk [vmem:[#allocation2 + $0x30] sm:$0xff] %vm800, %v795
      %v806 = vshrl.u32 %v207, 16
      %v808 = vrot.slane %v806, 4
      %v809 = vshll.u32 %v207, 16
      %v811 = vrot.slane %v809, 5
      %v812 = vor.u32 %v808, %v811
      %v813 = vrot.slane %v812, 4
      %v815 = vshll.u32 %v208, 16
      %v817 = vrot.slane %v815, 5
      %v818 = vsel %vm268, %v813, %v817
      %v819 = vshrl.u32 %v208, 16
      %v821 = vrot.slane %v819, 4
      %v822 = vor.u32 %v821, %v817
      %v823 = vrot.slane %v822, 4
      %v825 = vshll.u32 %v209, 16
      %v827 = vrot.slane %v825, 5
      %v828 = vsel %vm268, %v823, %v827
      %v829 = vunpack.c.l.b16 %v818
      %v830 = vunpack.c.l.b16 %v828
      %v831 = vpack.c.b16 %v830, %v829
      %832 = vrot.lane.b32.xlu0 %v600, 52
      %v833 = vpop.permute.xlu0 %832
      %834 = vrot.lane.b32.xlu0 %v725, 52
      %v835 = vpop.permute.xlu0 %834
      %836 = vrot.lane.b32.xlu0 %v726, 52
      %v837 = vpop.permute.xlu0 %836
      %838 = vrot.lane.b32.xlu0 %v831, 52
      %v839 = vpop.permute.xlu0 %838
      %vm844 = vcmask 458144
      %845 = vst.msk [vmem:[#allocation2] sm:$0xff] %vm844, %v833
      %846 = vst.msk [vmem:[#allocation2 + $0x10] sm:$0xff] %vm844, %v835
      %847 = vst.msk [vmem:[#allocation2 + $0x20] sm:$0xff] %vm844, %v837
      %848 = vst.msk [vmem:[#allocation2 + $0x30] sm:$0xff] %vm844, %v839
      %v850 = vrot.slane %v207, 5
      %v851 = vrot.slane %v850, 4
      %v852 = vrot.slane %v208, 5
      %v853 = vsel %vm400, %v851, %v852
      %v854 = vrot.slane %v852, 4
      %v855 = vrot.slane %v209, 5
      %v856 = vsel %vm400, %v854, %v855
      %v857 = vunpack.c.l.b16 %v853
      %v858 = vunpack.c.l.b16 %v856
      %v859 = vpack.c.b16 %v858, %v857
      %860 = vrot.lane.b32.xlu0 %v628, 56
      %v861 = vpop.permute.xlu0 %860
      %862 = vrot.lane.b32.xlu0 %v764, 56
      %v863 = vpop.permute.xlu0 %862
      %864 = vrot.lane.b32.xlu0 %v765, 56
      %v865 = vpop.permute.xlu0 %864
      %866 = vrot.lane.b32.xlu0 %v859, 56
      %v867 = vpop.permute.xlu0 %866
      %vm872 = vcmask 490944
      %873 = vst.msk [vmem:[#allocation2] sm:$0xff] %vm872, %v861
      %874 = vst.msk [vmem:[#allocation2 + $0x10] sm:$0xff] %vm872, %v863
      %875 = vst.msk [vmem:[#allocation2 + $0x20] sm:$0xff] %vm872, %v865
      %876 = vst.msk [vmem:[#allocation2 + $0x30] sm:$0xff] %vm872, %v867
      %v879 = vunpack.c.l.b16 %v210
      %v880 = vunpack.c.l.b16 %v211
      %v881 = vpack.c.b16 %v880, %v879
      %882 = vrot.lane.b32.xlu0 %v654, 60
      %v883 = vpop.permute.xlu0 %882
      %884 = vrot.lane.b32.xlu0 %v655, 60
      %v885 = vpop.permute.xlu0 %884
      %886 = vrot.lane.b32.xlu0 %v787, 60
      %v887 = vpop.permute.xlu0 %886
      %888 = vrot.lane.b32.xlu0 %v881, 60
      %v889 = vpop.permute.xlu0 %888
      %vm894 = vcmask 523744
      %895 = vst.msk [vmem:[#allocation2] sm:$0xff] %vm894, %v883
      %896 = vst.msk [vmem:[#allocation2 + $0x10] sm:$0xff] %vm894, %v885
      %897 = vst.msk [vmem:[#allocation2 + $0x20] sm:$0xff] %vm894, %v887
      %898 = vst.msk [vmem:[#allocation2 + $0x30] sm:$0xff] %vm894, %v889
      %v900 = vshrl.u32 %v210, 16
      %v902 = vrot.slane %v900, 4
      %v903 = vshll.u32 %v210, 16
      %v905 = vrot.slane %v903, 5
      %v906 = vor.u32 %v902, %v905
      %v907 = vrot.slane %v906, 4
      %v909 = vshll.u32 %v211, 16
      %v911 = vrot.slane %v909, 5
      %v912 = vsel %vm268, %v907, %v911
      %v913 = vshrl.u32 %v211, 16
      %v915 = vrot.slane %v913, 4
      %v916 = vor.u32 %v915, %v911
      %v917 = vrot.slane %v916, 4
      %v919 = vshll.u32 %v212, 16
      %v921 = vrot.slane %v919, 5
      %v922 = vsel %vm268, %v917, %v921
      %v923 = vunpack.c.l.b16 %v912
      %v924 = vunpack.c.l.b16 %v922
      %v925 = vpack.c.b16 %v924, %v923
      %926 = vrot.lane.b32.xlu0 %v725, 64
      %v927 = vpop.permute.xlu0 %926
      %928 = vrot.lane.b32.xlu0 %v726, 64
      %v929 = vpop.permute.xlu0 %928
      %930 = vrot.lane.b32.xlu0 %v831, 64
      %v931 = vpop.permute.xlu0 %930
      %932 = vrot.lane.b32.xlu0 %v925, 64
      %v933 = vpop.permute.xlu0 %932
      %vm938 = vcmask 556544
      %939 = vst.msk [vmem:[#allocation2] sm:$0xff] %vm938, %v927
      %940 = vst.msk [vmem:[#allocation2 + $0x10] sm:$0xff] %vm938, %v929
      %941 = vst.msk [vmem:[#allocation2 + $0x20] sm:$0xff] %vm938, %v931
      %942 = vst.msk [vmem:[#allocation2 + $0x30] sm:$0xff] %vm938, %v933
      %v944 = vrot.slane %v210, 5
      %v945 = vrot.slane %v944, 4
      %v946 = vrot.slane %v211, 5
      %v947 = vsel %vm400, %v945, %v946
      %v948 = vrot.slane %v946, 4
      %v949 = vrot.slane %v212, 5
      %v950 = vsel %vm400, %v948, %v949
      %v951 = vunpack.c.l.b16 %v947
      %v952 = vunpack.c.l.b16 %v950
      %v953 = vpack.c.b16 %v952, %v951
      %954 = vrot.lane.b32.xlu0 %v764, 68
      %v955 = vpop.permute.xlu0 %954
      %956 = vrot.lane.b32.xlu0 %v765, 68
      %v957 = vpop.permute.xlu0 %956
      %958 = vrot.lane.b32.xlu0 %v859, 68
      %v959 = vpop.permute.xlu0 %958
      %960 = vrot.lane.b32.xlu0 %v953, 68
      %v961 = vpop.permute.xlu0 %960
      %vm966 = vcmask 589344
      %967 = vst.msk [vmem:[#allocation2] sm:$0xff] %vm966, %v955
      %968 = vst.msk [vmem:[#allocation2 + $0x10] sm:$0xff] %vm966, %v957
      %969 = vst.msk [vmem:[#allocation2 + $0x20] sm:$0xff] %vm966, %v959
      %970 = vst.msk [vmem:[#allocation2 + $0x30] sm:$0xff] %vm966, %v961
      %v975 = vunpack.c.l.b16 %v213
      %v976 = vunpack.c.l.b16 %v214
      %v977 = vunpack.c.l.b16 %v216
      %v978 = vunpack.c.l.b16 %v217
      %v979 = vpack.c.b16 %v976, %v975
      %v980 = vpack.c.b16 %v978, %v977
      %981 = vrot.lane.b32.xlu0 %v787, 72
      %v982 = vpop.permute.xlu0 %981
      %983 = vrot.lane.b32.xlu0 %v881, 72
      %v984 = vpop.permute.xlu0 %983
      %985 = vrot.lane.b32.xlu0 %v979, 72
      %v986 = vpop.permute.xlu0 %985
      %987 = vrot.lane.b32.xlu0 %v980, 72
      %v988 = vpop.permute.xlu0 %987
      %vm993 = vcmask 622144
      %994 = vst.msk [vmem:[#allocation2] sm:$0xff] %vm993, %v982
      %995 = vst.msk [vmem:[#allocation2 + $0x10] sm:$0xff] %vm993, %v984
      %996 = vst.msk [vmem:[#allocation2 + $0x20] sm:$0xff] %vm993, %v986
      %997 = vst.msk [vmem:[#allocation2 + $0x30] sm:$0xff] %vm993, %v988
      %v999 = vshrl.u32 %v213, 16
      %v1001 = vrot.slane %v999, 4
      %v1002 = vshll.u32 %v213, 16
      %v1004 = vrot.slane %v1002, 5
      %v1005 = vor.u32 %v1001, %v1004
      %v1006 = vrot.slane %v1005, 4
      %v1008 = vshll.u32 %v214, 16
      %v1010 = vrot.slane %v1008, 5
      %v1011 = vsel %vm268, %v1006, %v1010
      %v1012 = vshrl.u32 %v214, 16
      %v1014 = vrot.slane %v1012, 4
      %v1015 = vor.u32 %v1014, %v1010
      %v1016 = vrot.slane %v1015, 4
      %v1018 = vshll.u32 %v215, 16
      %v1020 = vrot.slane %v1018, 5
      %v1021 = vsel %vm268, %v1016, %v1020
      %v1023 = vshrl.u32 %v216, 16
      %v1025 = vrot.slane %v1023, 4
      %v1026 = vshll.u32 %v216, 16
      %v1028 = vrot.slane %v1026, 5
      %v1029 = vor.u32 %v1025, %v1028
      %v1030 = vrot.slane %v1029, 4
      %v1032 = vshll.u32 %v217, 16
      %v1034 = vrot.slane %v1032, 5
      %v1035 = vsel %vm268, %v1030, %v1034
      %v1036 = vshrl.u32 %v217, 16
      %v1038 = vrot.slane %v1036, 4
      %v1039 = vor.u32 %v1038, %v1034
      %v1040 = vrot.slane %v1039, 4
      %v1042 = vshll.u32 %v218, 16
      %v1044 = vrot.slane %v1042, 5
      %v1045 = vsel %vm268, %v1040, %v1044
      %v1046 = vunpack.c.l.b16 %v1011
      %v1047 = vunpack.c.l.b16 %v1021
      %v1048 = vunpack.c.l.b16 %v1035
      %v1049 = vunpack.c.l.b16 %v1045
      %v1050 = vpack.c.b16 %v1047, %v1046
      %v1051 = vpack.c.b16 %v1049, %v1048
      %1052 = vrot.lane.b32.xlu0 %v831, 76
      %v1053 = vpop.permute.xlu0 %1052
      %1054 = vrot.lane.b32.xlu0 %v925, 76
      %v1055 = vpop.permute.xlu0 %1054
      %1056 = vrot.lane.b32.xlu0 %v1050, 76
      %v1057 = vpop.permute.xlu0 %1056
      %1058 = vrot.lane.b32.xlu0 %v1051, 76
      %v1059 = vpop.permute.xlu0 %1058
      %vm1064 = vcmask 654944
      %1065 = vst.msk [vmem:[#allocation2] sm:$0xff] %vm1064, %v1053
      %1066 = vst.msk [vmem:[#allocation2 + $0x10] sm:$0xff] %vm1064, %v1055
      %1067 = vst.msk [vmem:[#allocation2 + $0x20] sm:$0xff] %vm1064, %v1057
      %1068 = vst.msk [vmem:[#allocation2 + $0x30] sm:$0xff] %vm1064, %v1059
      %v1071 = vrot.slane %v213, 5
      %v1072 = vrot.slane %v1071, 4
      %v1073 = vrot.slane %v214, 5
      %v1074 = vsel %vm400, %v1072, %v1073
      %v1075 = vrot.slane %v1073, 4
      %v1076 = vrot.slane %v215, 5
      %v1077 = vsel %vm400, %v1075, %v1076
      %v1078 = vrot.slane %v216, 5
      %v1079 = vrot.slane %v1078, 4
      %v1080 = vrot.slane %v217, 5
      %v1081 = vsel %vm400, %v1079, %v1080
      %v1082 = vrot.slane %v1080, 4
      %v1083 = vrot.slane %v218, 5
      %v1084 = vsel %vm400, %v1082, %v1083
      %v1085 = vunpack.c.l.b16 %v1074
      %v1086 = vunpack.c.l.b16 %v1077
      %v1087 = vunpack.c.l.b16 %v1081
      %v1088 = vunpack.c.l.b16 %v1084
      %v1089 = vpack.c.b16 %v1086, %v1085
      %v1090 = vpack.c.b16 %v1088, %v1087
      %1091 = vrot.lane.b32.xlu0 %v859, 80
      %v1092 = vpop.permute.xlu0 %1091
      %1093 = vrot.lane.b32.xlu0 %v953, 80
      %v1094 = vpop.permute.xlu0 %1093
      %1095 = vrot.lane.b32.xlu0 %v1089, 80
      %v1096 = vpop.permute.xlu0 %1095
      %1097 = vrot.lane.b32.xlu0 %v1090, 80
      %v1098 = vpop.permute.xlu0 %1097
      %vm1103 = vcmask 687744
      %1104 = vst.msk [vmem:[#allocation2] sm:$0xff] %vm1103, %v1092
      %1105 = vst.msk [vmem:[#allocation2 + $0x10] sm:$0xff] %vm1103, %v1094
      %1106 = vst.msk [vmem:[#allocation2 + $0x20] sm:$0xff] %vm1103, %v1096
      %1107 = vst.msk [vmem:[#allocation2 + $0x30] sm:$0xff] %vm1103, %v1098
      %v1110 = vunpack.c.l.b16 %v219
      %v1111 = vunpack.c.l.b16 %v220
      %v1112 = vpack.c.b16 %v1111, %v1110
      %1113 = vrot.lane.b32.xlu0 %v881, 84
      %v1114 = vpop.permute.xlu0 %1113
      %1115 = vrot.lane.b32.xlu0 %v979, 84
      %v1116 = vpop.permute.xlu0 %1115
      %1117 = vrot.lane.b32.xlu0 %v980, 84
      %v1118 = vpop.permute.xlu0 %1117
      %1119 = vrot.lane.b32.xlu0 %v1112, 84
      %v1120 = vpop.permute.xlu0 %1119
      %vm1125 = vcmask 720544
      %1126 = vst.msk [vmem:[#allocation2] sm:$0xff] %vm1125, %v1114
      %1127 = vst.msk [vmem:[#allocation2 + $0x10] sm:$0xff] %vm1125, %v1116
      %1128 = vst.msk [vmem:[#allocation2 + $0x20] sm:$0xff] %vm1125, %v1118
      %1129 = vst.msk [vmem:[#allocation2 + $0x30] sm:$0xff] %vm1125, %v1120
      %v1131 = vshrl.u32 %v219, 16
      %v1133 = vrot.slane %v1131, 4
      %v1134 = vshll.u32 %v219, 16
      %v1136 = vrot.slane %v1134, 5
      %v1137 = vor.u32 %v1133, %v1136
      %v1138 = vrot.slane %v1137, 4
      %v1140 = vshll.u32 %v220, 16
      %v1142 = vrot.slane %v1140, 5
      %v1143 = vsel %vm268, %v1138, %v1142
      %v1144 = vshrl.u32 %v220, 16
      %v1146 = vrot.slane %v1144, 4
      %v1147 = vor.u32 %v1146, %v1142
      %v1148 = vrot.slane %v1147, 4
      %v1150 = vshll.u32 %v221, 16
      %v1152 = vrot.slane %v1150, 5
      %v1153 = vsel %vm268, %v1148, %v1152
      %v1154 = vunpack.c.l.b16 %v1143
      %v1155 = vunpack.c.l.b16 %v1153
      %v1156 = vpack.c.b16 %v1155, %v1154
      %1157 = vrot.lane.b32.xlu0 %v925, 88
      %v1158 = vpop.permute.xlu0 %1157
      %1159 = vrot.lane.b32.xlu0 %v1050, 88
      %v1160 = vpop.permute.xlu0 %1159
      %1161 = vrot.lane.b32.xlu0 %v1051, 88
      %v1162 = vpop.permute.xlu0 %1161
      %1163 = vrot.lane.b32.xlu0 %v1156, 88
      %v1164 = vpop.permute.xlu0 %1163
      %vm1169 = vcmask 753344
      %1170 = vst.msk [vmem:[#allocation2] sm:$0xff] %vm1169, %v1158
      %1171 = vst.msk [vmem:[#allocation2 + $0x10] sm:$0xff] %vm1169, %v1160
      %1172 = vst.msk [vmem:[#allocation2 + $0x20] sm:$0xff] %vm1169, %v1162
      %1173 = vst.msk [vmem:[#allocation2 + $0x30] sm:$0xff] %vm1169, %v1164
      %v1175 = vrot.slane %v219, 5
      %v1176 = vrot.slane %v1175, 4
      %v1177 = vrot.slane %v220, 5
      %v1178 = vsel %vm400, %v1176, %v1177
      %v1179 = vrot.slane %v1177, 4
      %v1180 = vrot.slane %v221, 5
      %v1181 = vsel %vm400, %v1179, %v1180
      %v1182 = vunpack.c.l.b16 %v1178
      %v1183 = vunpack.c.l.b16 %v1181
      %v1184 = vpack.c.b16 %v1183, %v1182
      %1185 = vrot.lane.b32.xlu0 %v953, 92
      %v1186 = vpop.permute.xlu0 %1185
      %1187 = vrot.lane.b32.xlu0 %v1089, 92
      %v1188 = vpop.permute.xlu0 %1187
      %1189 = vrot.lane.b32.xlu0 %v1090, 92
      %v1190 = vpop.permute.xlu0 %1189
      %1191 = vrot.lane.b32.xlu0 %v1184, 92
      %v1192 = vpop.permute.xlu0 %1191
      %vm1197 = vcmask 786144
      %1198 = vst.msk [vmem:[#allocation2] sm:$0xff] %vm1197, %v1186
      %1199 = vst.msk [vmem:[#allocation2 + $0x10] sm:$0xff] %vm1197, %v1188
      %1200 = vst.msk [vmem:[#allocation2 + $0x20] sm:$0xff] %vm1197, %v1190
      %1201 = vst.msk [vmem:[#allocation2 + $0x30] sm:$0xff] %vm1197, %v1192
      %v1204 = vunpack.c.l.b16 %v222
      %v1205 = vunpack.c.l.b16 %v223
      %v1206 = vpack.c.b16 %v1205, %v1204
      %1207 = vrot.lane.b32.xlu0 %v979, 96
      %v1208 = vpop.permute.xlu0 %1207
      %1209 = vrot.lane.b32.xlu0 %v980, 96
      %v1210 = vpop.permute.xlu0 %1209
      %1211 = vrot.lane.b32.xlu0 %v1112, 96
      %v1212 = vpop.permute.xlu0 %1211
      %1213 = vrot.lane.b32.xlu0 %v1206, 96
      %v1214 = vpop.permute.xlu0 %1213
      %vm1219 = vcmask 818944
      %1220 = vst.msk [vmem:[#allocation2] sm:$0xff] %vm1219, %v1208
      %1221 = vst.msk [vmem:[#allocation2 + $0x10] sm:$0xff] %vm1219, %v1210
      %1222 = vst.msk [vmem:[#allocation2 + $0x20] sm:$0xff] %vm1219, %v1212
      %1223 = vst.msk [vmem:[#allocation2 + $0x30] sm:$0xff] %vm1219, %v1214
      %v1225 = vshrl.u32 %v222, 16
      %v1227 = vrot.slane %v1225, 4
      %v1228 = vshll.u32 %v222, 16
      %v1230 = vrot.slane %v1228, 5
      %v1231 = vor.u32 %v1227, %v1230
      %v1232 = vrot.slane %v1231, 4
      %v1234 = vshll.u32 %v223, 16
      %v1236 = vrot.slane %v1234, 5
      %v1237 = vsel %vm268, %v1232, %v1236
      %v1238 = vshrl.u32 %v223, 16
      %v1240 = vrot.slane %v1238, 4
      %v1241 = vor.u32 %v1240, %v1236
      %v1242 = vrot.slane %v1241, 4
      %v1244 = vshll.u32 %v224, 16
      %v1246 = vrot.slane %v1244, 5
      %v1247 = vsel %vm268, %v1242, %v1246
      %v1248 = vunpack.c.l.b16 %v1237
      %v1249 = vunpack.c.l.b16 %v1247
      %v1250 = vpack.c.b16 %v1249, %v1248
      %1251 = vrot.lane.b32.xlu0 %v1050, 100
      %v1252 = vpop.permute.xlu0 %1251
      %1253 = vrot.lane.b32.xlu0 %v1051, 100
      %v1254 = vpop.permute.xlu0 %1253
      %1255 = vrot.lane.b32.xlu0 %v1156, 100
      %v1256 = vpop.permute.xlu0 %1255
      %1257 = vrot.lane.b32.xlu0 %v1250, 100
      %v1258 = vpop.permute.xlu0 %1257
      %vm1263 = vcmask 851744
      %1264 = vst.msk [vmem:[#allocation2] sm:$0xff] %vm1263, %v1252
      %1265 = vst.msk [vmem:[#allocation2 + $0x10] sm:$0xff] %vm1263, %v1254
      %1266 = vst.msk [vmem:[#allocation2 + $0x20] sm:$0xff] %vm1263, %v1256
      %1267 = vst.msk [vmem:[#allocation2 + $0x30] sm:$0xff] %vm1263, %v1258
      %v1269 = vrot.slane %v222, 5
      %v1270 = vrot.slane %v1269, 4
      %v1271 = vrot.slane %v223, 5
      %v1272 = vsel %vm400, %v1270, %v1271
      %v1273 = vrot.slane %v1271, 4
      %v1274 = vrot.slane %v224, 5
      %v1275 = vsel %vm400, %v1273, %v1274
      %v1276 = vunpack.c.l.b16 %v1272
      %v1277 = vunpack.c.l.b16 %v1275
      %v1278 = vpack.c.b16 %v1277, %v1276
      %1279 = vrot.lane.b32.xlu0 %v1089, 104
      %v1280 = vpop.permute.xlu0 %1279
      %1281 = vrot.lane.b32.xlu0 %v1090, 104
      %v1282 = vpop.permute.xlu0 %1281
      %1283 = vrot.lane.b32.xlu0 %v1184, 104
      %v1284 = vpop.permute.xlu0 %1283
      %1285 = vrot.lane.b32.xlu0 %v1278, 104
      %v1286 = vpop.permute.xlu0 %1285
      %vm1291 = vcmask 884544
      %1292 = vst.msk [vmem:[#allocation2] sm:$0xff] %vm1291, %v1280
      %1293 = vst.msk [vmem:[#allocation2 + $0x10] sm:$0xff] %vm1291, %v1282
      %1294 = vst.msk [vmem:[#allocation2 + $0x20] sm:$0xff] %vm1291, %v1284
      %1295 = vst.msk [vmem:[#allocation2 + $0x30] sm:$0xff] %vm1291, %v1286
      %v1300 = vunpack.c.l.b16 %v225
      %v1301 = vunpack.c.l.b16 %v226
      %v1302 = vunpack.c.l.b16 %v228
      %v1303 = vunpack.c.l.b16 %v229
      %v1304 = vpack.c.b16 %v1301, %v1300
      %v1305 = vpack.c.b16 %v1303, %v1302
      %1306 = vrot.lane.b32.xlu0 %v1112, 108
      %v1307 = vpop.permute.xlu0 %1306
      %1308 = vrot.lane.b32.xlu0 %v1206, 108
      %v1309 = vpop.permute.xlu0 %1308
      %1310 = vrot.lane.b32.xlu0 %v1304, 108
      %v1311 = vpop.permute.xlu0 %1310
      %1312 = vrot.lane.b32.xlu0 %v1305, 108
      %v1313 = vpop.permute.xlu0 %1312
      %vm1318 = vcmask 917344
      %1319 = vst.msk [vmem:[#allocation2] sm:$0xff] %vm1318, %v1307
      %1320 = vst.msk [vmem:[#allocation2 + $0x10] sm:$0xff] %vm1318, %v1309
      %1321 = vst.msk [vmem:[#allocation2 + $0x20] sm:$0xff] %vm1318, %v1311
      %1322 = vst.msk [vmem:[#allocation2 + $0x30] sm:$0xff] %vm1318, %v1313
      %v1324 = vshrl.u32 %v225, 16
      %v1326 = vrot.slane %v1324, 4
      %v1327 = vshll.u32 %v225, 16
      %v1329 = vrot.slane %v1327, 5
      %v1330 = vor.u32 %v1326, %v1329
      %v1331 = vrot.slane %v1330, 4
      %v1333 = vshll.u32 %v226, 16
      %v1335 = vrot.slane %v1333, 5
      %v1336 = vsel %vm268, %v1331, %v1335
      %v1337 = vshrl.u32 %v226, 16
      %v1339 = vrot.slane %v1337, 4
      %v1340 = vor.u32 %v1339, %v1335
      %v1341 = vrot.slane %v1340, 4
      %v1343 = vshll.u32 %v227, 16
      %v1345 = vrot.slane %v1343, 5
      %v1346 = vsel %vm268, %v1341, %v1345
      %v1348 = vshrl.u32 %v228, 16
      %v1350 = vrot.slane %v1348, 4
      %v1351 = vshll.u32 %v228, 16
      %v1353 = vrot.slane %v1351, 5
      %v1354 = vor.u32 %v1350, %v1353
      %v1355 = vrot.slane %v1354, 4
      %v1357 = vshll.u32 %v229, 16
      %v1359 = vrot.slane %v1357, 5
      %v1360 = vsel %vm268, %v1355, %v1359
      %v1361 = vshrl.u32 %v229, 16
      %v1363 = vrot.slane %v1361, 4
      %v1364 = vor.u32 %v1363, %v1359
      %v1365 = vrot.slane %v1364, 4
      %v1367 = vshll.u32 %v230, 16
      %v1369 = vrot.slane %v1367, 5
      %v1370 = vsel %vm268, %v1365, %v1369
      %v1371 = vunpack.c.l.b16 %v1336
      %v1372 = vunpack.c.l.b16 %v1346
      %v1373 = vunpack.c.l.b16 %v1360
      %v1374 = vunpack.c.l.b16 %v1370
      %v1375 = vpack.c.b16 %v1372, %v1371
      %v1376 = vpack.c.b16 %v1374, %v1373
      %1377 = vrot.lane.b32.xlu0 %v1156, 112
      %v1378 = vpop.permute.xlu0 %1377
      %1379 = vrot.lane.b32.xlu0 %v1250, 112
      %v1380 = vpop.permute.xlu0 %1379
      %1381 = vrot.lane.b32.xlu0 %v1375, 112
      %v1382 = vpop.permute.xlu0 %1381
      %1383 = vrot.lane.b32.xlu0 %v1376, 112
      %v1384 = vpop.permute.xlu0 %1383
      %vm1389 = vcmask 950144
      %1390 = vst.msk [vmem:[#allocation2] sm:$0xff] %vm1389, %v1378
      %1391 = vst.msk [vmem:[#allocation2 + $0x10] sm:$0xff] %vm1389, %v1380
      %1392 = vst.msk [vmem:[#allocation2 + $0x20] sm:$0xff] %vm1389, %v1382
      %1393 = vst.msk [vmem:[#allocation2 + $0x30] sm:$0xff] %vm1389, %v1384
      %v1396 = vrot.slane %v225, 5
      %v1397 = vrot.slane %v1396, 4
      %v1398 = vrot.slane %v226, 5
      %v1399 = vsel %vm400, %v1397, %v1398
      %v1400 = vrot.slane %v1398, 4
      %v1401 = vrot.slane %v227, 5
      %v1402 = vsel %vm400, %v1400, %v1401
      %v1403 = vrot.slane %v228, 5
      %v1404 = vrot.slane %v1403, 4
      %v1405 = vrot.slane %v229, 5
      %v1406 = vsel %vm400, %v1404, %v1405
      %v1407 = vrot.slane %v1405, 4
      %v1408 = vrot.slane %v230, 5
      %v1409 = vsel %vm400, %v1407, %v1408
      %v1410 = vunpack.c.l.b16 %v1399
      %v1411 = vunpack.c.l.b16 %v1402
      %v1412 = vunpack.c.l.b16 %v1406
      %v1413 = vunpack.c.l.b16 %v1409
      %v1414 = vpack.c.b16 %v1411, %v1410
      %v1415 = vpack.c.b16 %v1413, %v1412
      %1416 = vrot.lane.b32.xlu0 %v1184, 116
      %v1417 = vpop.permute.xlu0 %1416
      %1418 = vrot.lane.b32.xlu0 %v1278, 116
      %v1419 = vpop.permute.xlu0 %1418
      %1420 = vrot.lane.b32.xlu0 %v1414, 116
      %v1421 = vpop.permute.xlu0 %1420
      %1422 = vrot.lane.b32.xlu0 %v1415, 116
      %v1423 = vpop.permute.xlu0 %1422
      %vm1428 = vcmask 982944
      %1429 = vst.msk [vmem:[#allocation2] sm:$0xff] %vm1428, %v1417
      %1430 = vst.msk [vmem:[#allocation2 + $0x10] sm:$0xff] %vm1428, %v1419
      %1431 = vst.msk [vmem:[#allocation2 + $0x20] sm:$0xff] %vm1428, %v1421
      %1432 = vst.msk [vmem:[#allocation2 + $0x30] sm:$0xff] %vm1428, %v1423
      %v1435 = vunpack.c.l.b16 %v231
      %v1436 = vunpack.c.l.b16 %v232
      %v1437 = vpack.c.b16 %v1436, %v1435
      %1438 = vrot.lane.b32.xlu0 %v1206, 120
      %v1439 = vpop.permute.xlu0 %1438
      %1440 = vrot.lane.b32.xlu0 %v1304, 120
      %v1441 = vpop.permute.xlu0 %1440
      %1442 = vrot.lane.b32.xlu0 %v1305, 120
      %v1443 = vpop.permute.xlu0 %1442
      %1444 = vrot.lane.b32.xlu0 %v1437, 120
      %v1445 = vpop.permute.xlu0 %1444
      %vm1450 = vcmask 1015744
      %1451 = vst.msk [vmem:[#allocation2] sm:$0xff] %vm1450, %v1439
      %1452 = vst.msk [vmem:[#allocation2 + $0x10] sm:$0xff] %vm1450, %v1441
      %1453 = vst.msk [vmem:[#allocation2 + $0x20] sm:$0xff] %vm1450, %v1443
      %1454 = vst.msk [vmem:[#allocation2 + $0x30] sm:$0xff] %vm1450, %v1445
      %v1456 = vshrl.u32 %v231, 16
      %v1458 = vrot.slane %v1456, 4
      %v1459 = vshll.u32 %v231, 16
      %v1461 = vrot.slane %v1459, 5
      %v1462 = vor.u32 %v1458, %v1461
      %v1463 = vrot.slane %v1462, 4
      %v1465 = vshll.u32 %v232, 16
      %v1467 = vrot.slane %v1465, 5
      %v1468 = vsel %vm268, %v1463, %v1467
      %v1469 = vshrl.u32 %v232, 16
      %v1471 = vrot.slane %v1469, 4
      %v1472 = vor.u32 %v1471, %v1467
      %v1473 = vrot.slane %v1472, 4
      %v1475 = vshll.u32 %v233, 16
      %v1477 = vrot.slane %v1475, 5
      %v1478 = vsel %vm268, %v1473, %v1477
      %v1479 = vunpack.c.l.b16 %v1468
      %v1480 = vunpack.c.l.b16 %v1478
      %v1481 = vpack.c.b16 %v1480, %v1479
      %1482 = vrot.lane.b32.xlu0 %v1250, 124
      %v1483 = vpop.permute.xlu0 %1482
      %1484 = vrot.lane.b32.xlu0 %v1375, 124
      %v1485 = vpop.permute.xlu0 %1484
      %1486 = vrot.lane.b32.xlu0 %v1376, 124
      %v1487 = vpop.permute.xlu0 %1486
      %1488 = vrot.lane.b32.xlu0 %v1481, 124
      %v1489 = vpop.permute.xlu0 %1488
      %vm1494 = vcmask 1048544
      %1495 = vst.msk [vmem:[#allocation2] sm:$0xff] %vm1494, %v1483
      %1496 = vst.msk [vmem:[#allocation2 + $0x10] sm:$0xff] %vm1494, %v1485
      %1497 = vst.msk [vmem:[#allocation2 + $0x20] sm:$0xff] %vm1494, %v1487
      %1498 = vst.msk [vmem:[#allocation2 + $0x30] sm:$0xff] %vm1494, %v1489
      %v1500 = vrot.slane %v231, 5
      %v1501 = vrot.slane %v1500, 4
      %v1502 = vrot.slane %v232, 5
      %v1503 = vsel %vm400, %v1501, %v1502
      %v1504 = vrot.slane %v1502, 4
      %v1505 = vrot.slane %v233, 5
      %v1506 = vsel %vm400, %v1504, %v1505
      %v1507 = vunpack.c.l.b16 %v1503
      %v1508 = vunpack.c.l.b16 %v1506
      %v1509 = vpack.c.b16 %v1508, %v1507
      %1514 = vst.msk [vmem:[#allocation2 + $0x8] sm:$0xff] %vm261, %v1278
      %1515 = vst.msk [vmem:[#allocation2 + $0x18] sm:$0xff] %vm261, %v1414
      %1516 = vst.msk [vmem:[#allocation2 + $0x28] sm:$0xff] %vm261, %v1415
      %1517 = vst.msk [vmem:[#allocation2 + $0x38] sm:$0xff] %vm261, %v1509
      %v1520 = vunpack.c.l.b16 %v234
      %v1521 = vunpack.c.l.b16 %v235
      %v1522 = vpack.c.b16 %v1521, %v1520
      %1523 = vrot.lane.b32.xlu0 %v1304, 4
      %v1524 = vpop.permute.xlu0 %1523
      %1525 = vrot.lane.b32.xlu0 %v1305, 4
      %v1526 = vpop.permute.xlu0 %1525
      %1527 = vrot.lane.b32.xlu0 %v1437, 4
      %v1528 = vpop.permute.xlu0 %1527
      %1529 = vrot.lane.b32.xlu0 %v1522, 4
      %v1530 = vpop.permute.xlu0 %1529
      %1535 = vst.msk [vmem:[#allocation2 + $0x8] sm:$0xff] %vm389, %v1524
      %1536 = vst.msk [vmem:[#allocation2 + $0x18] sm:$0xff] %vm389, %v1526
      %1537 = vst.msk [vmem:[#allocation2 + $0x28] sm:$0xff] %vm389, %v1528
      %1538 = vst.msk [vmem:[#allocation2 + $0x38] sm:$0xff] %vm389, %v1530
      %v1540 = vshrl.u32 %v234, 16
      %v1542 = vrot.slane %v1540, 4
      %v1543 = vshll.u32 %v234, 16
      %v1545 = vrot.slane %v1543, 5
      %v1546 = vor.u32 %v1542, %v1545
      %v1547 = vrot.slane %v1546, 4
      %v1549 = vshll.u32 %v235, 16
      %v1551 = vrot.slane %v1549, 5
      %v1552 = vsel %vm268, %v1547, %v1551
      %v1553 = vshrl.u32 %v235, 16
      %v1555 = vrot.slane %v1553, 4
      %v1556 = vor.u32 %v1555, %v1551
      %v1557 = vrot.slane %v1556, 4
      %v1559 = vshll.u32 %v236, 16
      %v1561 = vrot.slane %v1559, 5
      %v1562 = vsel %vm268, %v1557, %v1561
      %v1563 = vunpack.c.l.b16 %v1552
      %v1564 = vunpack.c.l.b16 %v1562
      %v1565 = vpack.c.b16 %v1564, %v1563
      %1566 = vrot.lane.b32.xlu0 %v1375, 8
      %v1567 = vpop.permute.xlu0 %1566
      %1568 = vrot.lane.b32.xlu0 %v1376, 8
      %v1569 = vpop.permute.xlu0 %1568
      %1570 = vrot.lane.b32.xlu0 %v1481, 8
      %v1571 = vpop.permute.xlu0 %1570
      %1572 = vrot.lane.b32.xlu0 %v1565, 8
      %v1573 = vpop.permute.xlu0 %1572
      %1578 = vst.msk [vmem:[#allocation2 + $0x8] sm:$0xff] %vm453, %v1567
      %1579 = vst.msk [vmem:[#allocation2 + $0x18] sm:$0xff] %vm453, %v1569
      %1580 = vst.msk [vmem:[#allocation2 + $0x28] sm:$0xff] %vm453, %v1571
      %1581 = vst.msk [vmem:[#allocation2 + $0x38] sm:$0xff] %vm453, %v1573
      %v1583 = vrot.slane %v234, 5
      %v1584 = vrot.slane %v1583, 4
      %v1585 = vrot.slane %v235, 5
      %v1586 = vsel %vm400, %v1584, %v1585
      %v1587 = vrot.slane %v1585, 4
      %v1588 = vrot.slane %v236, 5
      %v1589 = vsel %vm400, %v1587, %v1588
      %v1590 = vunpack.c.l.b16 %v1586
      %v1591 = vunpack.c.l.b16 %v1589
      %v1592 = vpack.c.b16 %v1591, %v1590
      %1593 = vrot.lane.b32.xlu0 %v1414, 12
      %v1594 = vpop.permute.xlu0 %1593
      %1595 = vrot.lane.b32.xlu0 %v1415, 12
      %v1596 = vpop.permute.xlu0 %1595
      %1597 = vrot.lane.b32.xlu0 %v1509, 12
      %v1598 = vpop.permute.xlu0 %1597
      %1599 = vrot.lane.b32.xlu0 %v1592, 12
      %v1600 = vpop.permute.xlu0 %1599
      %1605 = vst.msk [vmem:[#allocation2 + $0x8] sm:$0xff] %vm475, %v1594
      %1606 = vst.msk [vmem:[#allocation2 + $0x18] sm:$0xff] %vm475, %v1596
      %1607 = vst.msk [vmem:[#allocation2 + $0x28] sm:$0xff] %vm475, %v1598
      %1608 = vst.msk [vmem:[#allocation2 + $0x38] sm:$0xff] %vm475, %v1600
      %v1609 = vld [vmem:[#allocation2] sm:$0xff]
      %v1610 = vld [vmem:[#allocation2 + $0x8] sm:$0xff]
      %v1611 = vld [vmem:[#allocation2 + $0x10] sm:$0xff]
      %v1612 = vld [vmem:[#allocation2 + $0x18] sm:$0xff]
      %v1613 = vld [vmem:[#allocation2 + $0x20] sm:$0xff]
      %v1614 = vld [vmem:[#allocation2 + $0x28] sm:$0xff]
      %v1615 = vld [vmem:[#allocation2 + $0x30] sm:$0xff]
      %v1616 = vld [vmem:[#allocation2 + $0x38] sm:$0xff]
      %v1617 = vld [vmem:[%s1] sm:$0xf]
      %v1618 = vld [vmem:[%s1 + $0x4] sm:$0xf]
      %v1619 = vld [vmem:[%s1 + $0x8] sm:$0xf]
      %v1620 = vld [vmem:[%s1 + $0xc] sm:$0xf]
      %v1621 = vld [vmem:[%s1 + $0x10] sm:$0xf]
      %v1622 = vld [vmem:[%s1 + $0x14] sm:$0xf]
      %v1623 = vld [vmem:[%s1 + $0x18] sm:$0xf]
      %v1624 = vld [vmem:[%s1 + $0x1c] sm:$0xf]
      %v1625 = vld [vmem:[%s1 + $0x20] sm:$0xf]
      %v1626 = vld [vmem:[%s1 + $0x24] sm:$0xf]
      %v1627 = vld [vmem:[%s1 + $0x28] sm:$0xf]
      %v1628 = vld [vmem:[%s1 + $0x2c] sm:$0xf]
      %v1629 = vld [vmem:[%s1 + $0x30] sm:$0xf]
      %v1630 = vld [vmem:[%s1 + $0x34] sm:$0xf]
      %v1631 = vld [vmem:[%s1 + $0x38] sm:$0xf]
      %v1632 = vld [vmem:[%s1 + $0x3c] sm:$0xf]
      %v1633 = vld [vmem:[%s1 + $0x40] sm:$0xf]
      %v1634 = vld [vmem:[%s1 + $0x44] sm:$0xf]
      %v1653 = vunpack.c.l.b16 %v1617
      %v1654 = vunpack.c.l.b16 %v1618
      %v1655 = vunpack.c.l.b16 %v1619
      %v1656 = vunpack.c.l.b16 %v1620
      %v1657 = vunpack.c.l.b16 %v1621
      %v1658 = vunpack.c.l.b16 %v1622
      %v1659 = vunpack.c.l.b16 %v1623
      %v1660 = vunpack.c.l.b16 %v1624
      %v1661 = vunpack.c.l.b16 %v1625
      %v1662 = vunpack.c.l.b16 %v1626
      %v1663 = vunpack.c.l.b16 %v1627
      %v1664 = vunpack.c.l.b16 %v1628
      %v1665 = vunpack.c.l.b16 %v1629
      %v1666 = vunpack.c.l.b16 %v1630
      %v1667 = vunpack.c.l.b16 %v1631
      %v1668 = vunpack.c.l.b16 %v1632
      %v1669 = vunpack.c.l.b16 %v1633
      %v1670 = vunpack.c.l.b16 %v1634
      %v1671 = vpack.c.b16 %v1654, %v1653
      %v1672 = vpack.c.b16 %v1656, %v1655
      %v1673 = vpack.c.b16 %v1658, %v1657
      %v1674 = vpack.c.b16 %v1660, %v1659
      %v1675 = vpack.c.b16 %v1662, %v1661
      %v1676 = vpack.c.b16 %v1664, %v1663
      %v1677 = vpack.c.b16 %v1666, %v1665
      %v1678 = vpack.c.b16 %v1668, %v1667
      %v1679 = vpack.c.b16 %v1670, %v1669
      %vm1689 = vcmask 130048
      %v1691 = vsel %vm1689, %v1610, 0
      %v1694 = vsel %vm1689, %v1612, 0
      %v1697 = vsel %vm1689, %v1614, 0
      %v1700 = vsel %vm1689, %v1616, 0
      %1702 = vmatprep.subr.bf16.mxu0 0
      %1703 = vmatpush1.bf16.msra.mxu0 %v1671
      %1704 = vmatprep.subr.bf16.mxu0 0
      %1705 = vmatpush1.bf16.msra.mxu0 %v1672
      %1706 = vmatprep.subr.bf16.mxu0 0
      %1707 = vmatpush1.bf16.msra.mxu0 %v1673
      %1708 = vmatprep.subr.bf16.mxu0 0
      %1709 = vmatpush1.bf16.msra.mxu0 %v1674
      %1710 = vmatprep.subr.bf16.mxu0 0
      %1711 = vmatpush1.bf16.msra.mxu0 %v1675
      %1712 = vmatprep.subr.bf16.mxu0 0
      %1713 = vmatpush1.bf16.msra.mxu0 %v1676
      %1714 = vmatprep.subr.bf16.mxu0 0
      %1715 = vmatpush1.bf16.msra.mxu0 %v1677
      %1716 = vmatprep.subr.bf16.mxu0 0
      %1717 = vmatpush1.bf16.msra.mxu0 %v1678
      %1718 = vmatprep.subr.bf16.mxu0 0
      %1719 = vmatpush1.bf16.msra.mxu0 %v1679
      %1720 = vmatprep.subr.bf16.mxu0 0
      %1721 = vmatpush1.bf16.msra.mxu0 0
      %1722 = vmatprep.subr.bf16.mxu0 0
      %1723 = vmatpush1.bf16.msra.mxu0 0
      %1724 = vmatprep.subr.bf16.mxu0 0
      %1725 = vmatpush1.bf16.msra.mxu0 0
      %1726 = vmatprep.subr.bf16.mxu0 0
      %1727 = vmatpush1.bf16.msra.mxu0 0
      %1728 = vmatprep.subr.bf16.mxu0 0
      %1729 = vmatpush1.bf16.msra.mxu0 0
      %1730 = vmatprep.subr.bf16.mxu0 0
      %1731 = vmatpush1.bf16.msra.mxu0 0
      %1732 = vmatprep.subr.bf16.mxu0 0
      %1733 = vmatpush1.bf16.msra.mxu0 0
      %1734 = vmatprep.mubr.bf16.mxu0 %v1691
      %1735 = vmatmul.mubr.bf16.gmra.mrb[0].mxu0 %v1609
      %v1736 = vpop.f32.mrb[0].mxu0
      %v1737 = vadd.f32 0.0, %v1736
      %v1738 = vpop.f32.mrb[0].mxu0
      %v1739 = vpop.f32.mrb[0].mxu0
      %v1740 = vadd.f32 0.0, %v1739
      %v1741 = vpop.f32.mrb[0].mxu0
      %1742 = vmatprep.mubr.bf16.mxu0 %v1694
      %1743 = vmatmul.mubr.bf16.gmra.mrb[0].mxu0 %v1611
      %v1744 = vpop.f32.mrb[0].mxu0
      %v1745 = vadd.f32 0.0, %v1744
      %v1746 = vpop.f32.mrb[0].mxu0
      %v1747 = vpop.f32.mrb[0].mxu0
      %v1748 = vadd.f32 0.0, %v1747
      %v1749 = vpop.f32.mrb[0].mxu0
      %1750 = vmatprep.mubr.bf16.mxu0 %v1697
      %1751 = vmatmul.mubr.bf16.gmra.mrb[0].mxu0 %v1613
      %v1752 = vpop.f32.mrb[0].mxu0
      %v1753 = vadd.f32 0.0, %v1752
      %v1754 = vpop.f32.mrb[0].mxu0
      %v1755 = vpop.f32.mrb[0].mxu0
      %v1756 = vadd.f32 0.0, %v1755
      %v1757 = vpop.f32.mrb[0].mxu0
      %1758 = vmatprep.mubr.bf16.mxu0 %v1700
      %1759 = vmatmul.mubr.bf16.gmra.mrb[0].mxu0 %v1615
      %v1760 = vpop.f32.mrb[0].mxu0
      %v1761 = vadd.f32 0.0, %v1760
      %v1762 = vpop.f32.mrb[0].mxu0
      %v1763 = vpop.f32.mrb[0].mxu0
      %v1764 = vadd.f32 0.0, %v1763
      %v1765 = vpop.f32.mrb[0].mxu0
      %1766 = vdwg.mxu0
      %v1767 = vadd.f32 %v1737, %v1740
      %v1768 = vadd.f32 %v1767, %v1745
      %v1769 = vadd.f32 %v1768, %v1748
      %v1770 = vadd.f32 %v1769, %v1753
      %v1771 = vadd.f32 %v1770, %v1756
      %v1772 = vadd.f32 %v1771, %v1761
      %v1773 = vadd.f32 %v1772, %v1764
      %v1774 = vrot.slane %v1773, 4
      %v1775 = vadd.f32 %v1773, %v1774
      %v1776 = vrot.slane %v1775, 2
      %v1777 = vadd.f32 %v1775, %v1776
      %v1778 = vrot.slane %v1777, 1
      %v1779 = vadd.f32 %v1777, %v1778
      %1780 = vst [vmem:[%s181] sm:$0x1] %v1779
      %v1781 = vmul.f32 %v1737, %v1737
      %v1782 = vmul.f32 %v1740, %v1740
      %v1783 = vmul.f32 %v1745, %v1745
      %v1784 = vmul.f32 %v1748, %v1748
      %v1785 = vmul.f32 %v1753, %v1753
      %v1786 = vmul.f32 %v1756, %v1756
      %v1787 = vmul.f32 %v1761, %v1761
      %v1788 = vmul.f32 %v1764, %v1764
      %v1789 = vadd.f32 %v1781, %v1782
      %v1790 = vadd.f32 %v1789, %v1783
      %v1791 = vadd.f32 %v1790, %v1784
      %v1792 = vadd.f32 %v1791, %v1785
      %v1793 = vadd.f32 %v1792, %v1786
      %v1794 = vadd.f32 %v1793, %v1787
      %v1795 = vadd.f32 %v1794, %v1788
      %v1796 = vrot.slane %v1795, 4
      %v1797 = vadd.f32 %v1795, %v1796
      %v1798 = vrot.slane %v1797, 2
      %v1799 = vadd.f32 %v1797, %v1798
      %v1800 = vrot.slane %v1799, 1
      %v1801 = vadd.f32 %v1799, %v1800
      %1802 = vst [vmem:[%s181 + $0x1] sm:$0x1] %v1801
      %v1803 = vpack.c.bf16 %v1740, %v1737
      %v1804 = vpack.c.bf16 %v1748, %v1745
      %v1805 = vpack.c.bf16 %v1756, %v1753
      %v1806 = vpack.c.bf16 %v1764, %v1761
      %v1811 = vunpack.c.l.b16 %v1803
      %v1812 = vunpack.c.h.b16 %v1803
      %v1813 = vunpack.c.l.b16 %v1804
      %v1814 = vunpack.c.h.b16 %v1804
      %v1815 = vunpack.c.l.b16 %v1805
      %v1816 = vunpack.c.h.b16 %v1805
      %v1817 = vunpack.c.l.b16 %v1806
      %v1818 = vunpack.c.h.b16 %v1806
      %v1819 = vpack.c.b16 %v1811, %v1811
      %v1820 = vpack.c.b16 %v1812, %v1812
      %v1821 = vpack.c.b16 %v1813, %v1813
      %v1822 = vpack.c.b16 %v1814, %v1814
      %v1823 = vpack.c.b16 %v1815, %v1815
      %v1824 = vpack.c.b16 %v1816, %v1816
      %v1825 = vpack.c.b16 %v1817, %v1817
      %v1826 = vpack.c.b16 %v1818, %v1818
      %1835 = vst [vmem:[%s177] sm:$0xf] %v1819
      %1836 = vst [vmem:[%s177 + $0x4] sm:$0xf] %v1820
      %1837 = vst [vmem:[%s177 + $0x8] sm:$0xf] %v1821
      %1838 = vst [vmem:[%s177 + $0xc] sm:$0xf] %v1822
      %1839 = vst [vmem:[%s177 + $0x10] sm:$0xf] %v1823
      %1840 = vst [vmem:[%s177 + $0x14] sm:$0xf] %v1824
      %1841 = vst [vmem:[%s177 + $0x18] sm:$0xf] %v1825
      %1842 = vst [vmem:[%s177 + $0x1c] sm:$0xf] %v1826
      %p1843 = scmp.lt.s32.totalorder %s15, 1
      %s1844 = scalar_select %p1843, %s15, 1
      %s1845 = smul.addr %s1844, 8
      %s1846 = smul.addr %s1845, 4
      %s1847 = scalar_lea.vmem %s2, %s1846
      %p1848 = scmp.lt.s32.totalorder %s15, 1
      %s1849 = scalar_select %p1848, %s15, 1
      %s1850 = smul.addr %s1849, 2
      %s1851 = scalar_lea.vmem %s3, %s1850
      // Predicated region
      $region29: #{upconv_block.2} parent=27 // pred_check
        %p1852 = pneg %p80
      $region30: #{upconv_block.2} parent=27 // pred_check_branch
        %1854 = sbr.rel (%p1852) target = $region32
      $region31: #{upconv_block.2} parent=27 // pred_region
        _
      $region32: #{upconv_block.2} parent=27 // pred_fallthru
        _
      // Predicated region
      $region33: #{upconv_block.2} parent=27 // pred_check
        %p1855 = pneg %p106
      $region34: #{upconv_block.2} parent=27 // pred_check_branch
        %1857 = sbr.rel (%p1855) target = $region36
      $region35: #{upconv_block.2} parent=27 // pred_region
        _
      $region36: #{upconv_block.2} parent=27 // pred_fallthru
        _
    $region28: #{upconv_block.2} parent=5 // pred_fallthru
      _
    %p1858 = scmp.le.s32.totalorder 2, %s10
    // Predicated region
    $region37: #{upconv_block.2} parent=5 // pred_check
      %p1859 = pneg %p1858
    $region38: #{upconv_block.2} parent=5 // pred_check_branch
      %1861 = sbr.rel (%p1859) target = $region40
    $region39: #{upconv_block.2} parent=5 // pred_region
      %s1862 = ssub.s32 %s10, 2
      // Predicated region
      $region41: #{upconv_block.2} parent=39 // pred_check
        %p1863 = pneg %p86
      $region42: #{upconv_block.2} parent=39 // pred_check_branch
        %1865 = sbr.rel (%p1863) target = $region44
      $region43: #{upconv_block.2} parent=39 // pred_region
        %p1866 = scmp.lt.s32.totalorder %s16, 1
        %s1867 = scalar_select %p1866, %s16, 1
        %s1868 = smul.addr %s1867, 8
        %s1869 = smul.addr %s1868, 4
        %s1870 = scalar_lea.vmem %s2, %s1869
      $region44: #{upconv_block.2} parent=39 // pred_fallthru
        _
      // Predicated region
      $region45: #{upconv_block.2} parent=39 // pred_check
        %p1871 = pneg %p112
      $region46: #{upconv_block.2} parent=39 // pred_check_branch
        %1873 = sbr.rel (%p1871) target = $region48
      $region47: #{upconv_block.2} parent=39 // pred_region
        %p1874 = scmp.lt.s32.totalorder %s16, 1
        %s1875 = scalar_select %p1874, %s16, 1
        %s1876 = smul.addr %s1875, 2
        %s1877 = scalar_lea.vmem %s3, %s1876
      $region48: #{upconv_block.2} parent=39 // pred_fallthru
        _
    $region40: #{upconv_block.2} parent=5 // pred_fallthru
      _
  $region6: #{upconv_block.2} parent=0 // loop_footer
    %s14 = sadd.s32 1, %s10
  $region7: #{upconv_block.2} parent=0 // loop_footer_branch
    %9 = sbr.rel target = $region3
  $region8: #{upconv_block.2} parent=0 // loop_exit
    _

</llo_original>
